<compile_context>
chip_gen: v7x
topology: tpu7x:2x2x1
jax: 0.10.0
libtpu: 0.0.40
codegen_flags: <defaults>
</compile_context>

<pallas_src>
import math

import jax
import jax.numpy as jnp
from jax.experimental import pallas as pl
from jax.experimental.pallas import tpu as pltpu


# ----------------------------------------------------------------------------
# Host-side precomputation of constant operands.
# ----------------------------------------------------------------------------
def _col_upsample_mats(w_in, wo, cout):
    """(3*w_in, Cout*Wo) 0/1 matrices: for column tap dx, x_row @ R_dx yields the
    dx-shifted, zero-padded, nearest-x2-upsampled row replicated across the Cout
    lane stripes (so the FMA loop never needs jnp.tile)."""
    xcols = jnp.arange(wo)                       # output column X
    jcols = jnp.arange(w_in)                     # source column j
    mats = []
    for dx in range(3):
        c = xcols + dx - 1                       # upsampled (padded) column index
        valid = (c >= 0) & (c < wo)
        src = jnp.where(valid, c // 2, -1)       # source column (or no source)
        m = (src[None, :] == jcols[:, None]).astype(jnp.float32)   # (w_in, wo)
        mats.append(jnp.tile(m, (1, cout)))      # replicate per Cout stripe
    return jnp.concatenate(mats, axis=0)         # (3*w_in, cout*wo)


def _row_interleave_mat(h):
    """(2H, 2H) 0/1 matrix: [L | R] @ concat([acc_even, acc_odd]) interleaves the
    two row-phase accumulators into the final output row order."""
    ho = 2 * h
    yy = jnp.arange(ho)
    src = jnp.where(yy % 2 == 0, yy // 2, h + yy // 2)
    return (jnp.arange(2 * h)[None, :] == src[:, None]).astype(jnp.float32)


def _phase_weight_table(weight, wo):
    """Lane-striped row-polyphase weight table.

    weight: (Cout, Cin, 3, 3) OIHW.
    Returns (2*Cin*2*3, Cout*Wo) f32 where row ((py*Cin+ci)*2 + a)*3 + dx holds
    the folded row-phase weight Wr[py][co, ci, a, dx] broadcast across the
    co-th Wo-wide lane stripe.
      py=0 (even output rows): a=0 -> w[0,dx],        a=1 -> w[1,dx]+w[2,dx]
      py=1 (odd  output rows): a=0 -> w[0,dx]+w[1,dx], a=1 -> w[2,dx]
    """
    cout, cin, _, _ = weight.shape
    w = weight.astype(jnp.float32)
    wr0 = jnp.stack([w[:, :, 0, :], w[:, :, 1, :] + w[:, :, 2, :]], axis=2)
    wr1 = jnp.stack([w[:, :, 0, :] + w[:, :, 1, :], w[:, :, 2, :]], axis=2)
    wr = jnp.stack([wr0, wr1], axis=0)                 # (2, Cout, Cin, 2, 3)
    wr = jnp.transpose(wr, (0, 2, 3, 4, 1))            # (2, Cin, 2, 3, Cout)
    wr = jnp.repeat(wr, wo, axis=-1)                   # (2, Cin, 2, 3, Cout*Wo)
    return wr.reshape(2 * cin * 2 * 3, cout * wo)


def _default_batch_block(n):
    """Batch elements per grid step: merge steps on single-TC chips (v5e/v6e),
    keep >=2 parallel steps for dual-TC chips (v7x, v4/v5p, unknown)."""
    try:
        kind = jax.devices()[0].device_kind.lower()
    except Exception:  # pragma: no cover - defensive
        kind = ""
    single_tc = any(t in kind for t in ("v5 lite", "v5e", "v6 lite", "v6e"))
    if single_tc:
        return n
    if n % 2 == 0:
        return max(1, n // 2)
    return 1


# ----------------------------------------------------------------------------
# Kernel.
# ----------------------------------------------------------------------------
def _upsample_conv3x3_kernel(xr_ref, rmats_ref, lcat_ref, wtab_ref, brow_ref,
                             o_ref, vps_ref):
    """Fused nearest-x2 upsample + 3x3 'same' conv for a block of batch elems.

    xr_ref:    (bb, Cin*H, W)        input block, rows flattened as (ci, i)
    rmats_ref: (3*W, Cout*Wo)        column tap 0/1 expansion matrices
    lcat_ref:  (2H, 2H)              row-interleave 0/1 matrix
    wtab_ref:  (2*Cin*2*3, Cout*Wo)  lane-striped row-phase weights
    brow_ref:  (1, Cout*Wo)          lane-striped bias
    o_ref:     (bb, Cout, 2H, 2W)    output block (final NCHW layout)
    vps_ref:   (3*Cin, H+2, Cout*Wo) scratch: per (dx, ci) column-expanded rows
                                     with zero guard rows at 0 and H+1
    """
    bb = xr_ref.shape[0]
    w = xr_ref.shape[2]
    _, cout, ho, wo = o_ref.shape
    h = ho // 2
    cin = xr_ref.shape[1] // h
    lanes = cout * wo

    # Zero guard rows once per grid step (they are never overwritten, so all
    # row-tap reads at i-1 / i+1 past the image border see zeros).
    zrow = jnp.zeros((1, lanes), jnp.float32)
    for p in range(3 * cin):
        vps_ref[p, 0:1, :] = zrow
        vps_ref[p, h + 1:h + 2, :] = zrow

    bias_block = jnp.broadcast_to(brow_ref[...], (h, lanes))   # hoisted
    lcat = lcat_ref[...]

    def wrow(py, ci, a, dx):
        r = ((py * cin + ci) * 2 + a) * 3 + dx
        return wtab_ref[r:r + 1, :]          # (1, lanes), broadcasts over rows

    # NOTE: bb <= 2 at these shapes; for large bb use lax.fori_loop(unroll=True).
    for b in range(bb):
        xb = xr_ref[b].astype(jnp.float32)                       # (Cin*H, W)

        # Column handling on the MXU: one (Cin*H, W) @ (W, Cout*Wo) matmul per
        # column tap dx produces the dx-shifted, zero-padded, nearest-upsampled
        # rows already replicated across the Cout lane stripes.
        for dx in range(3):
            slab = jnp.dot(xb, rmats_ref[dx * w:(dx + 1) * w, :],
                           preferred_element_type=jnp.float32)   # (Cin*H, lanes)
            for ci in range(cin):
                vps_ref[dx * cin + ci, 1:h + 1, :] = slab[ci * h:(ci + 1) * h, :]

        # Row-polyphase 2-tap conv with fully lane-dense accumulators.
        acc0 = bias_block      # even output rows 2i
        acc1 = bias_block      # odd  output rows 2i+1
        for ci in range(cin):
            for dx in range(3):
                p = dx * cin + ci
                s0 = vps_ref[p, 0:h, :]          # input rows i-1 (top row = 0)
                s1 = vps_ref[p, 1:h + 1, :]      # input rows i
                s2 = vps_ref[p, 2:h + 2, :]      # input rows i+1 (bottom row = 0)
                acc0 = acc0 + s0 * wrow(0, ci, 0, dx) + s1 * wrow(0, ci, 1, dx)
                acc1 = acc1 + s1 * wrow(1, ci, 0, dx) + s2 * wrow(1, ci, 1, dx)

        # Row-interleave the two phases with one tiny 0/1 matmul, then store
        # per output channel directly into the NCHW output block.
        slab_out = jnp.dot(lcat, jnp.concatenate([acc0, acc1], axis=0),
                           preferred_element_type=jnp.float32)   # (2H, lanes)
        for co in range(cout):
            o_ref[b, co] = slab_out[:, co * wo:(co + 1) * wo].astype(o_ref.dtype)


# ----------------------------------------------------------------------------
# Wrapper.
# ----------------------------------------------------------------------------
def upsample_forward(x, weight=None, bias=None, *, use_conv=True, batch_block=None):
    """Pallas implementation of Upsample.forward (dims=2).

    x:      (N, C, H, W) NCHW (same as PyTorch)
    weight: (Cout, Cin, 3, 3), bias: (Cout,)  (only used when use_conv=True)
    returns (N, Cout, 2H, 2W)
    """
    n, c, h, w = x.shape
    if not use_conv:
        # Pure nearest-neighbor x2 upsample (data replication only).
        return jnp.repeat(jnp.repeat(x, 2, axis=2), 2, axis=3)

    cout, cin, kh, kw = weight.shape
    assert cin == c and kh == 3 and kw == 3
    ho, wo = 2 * h, 2 * w
    lanes = cout * wo

    if batch_block is None:
        batch_block = _default_batch_block(n)
    assert n % batch_block == 0
    bb = batch_block

    # Host-precomputed constant operands (never rebuilt inside the kernel).
    rmats = _col_upsample_mats(w, wo, cout)                       # (3W, lanes)
    lcat = _row_interleave_mat(h)                                 # (2H, 2H)
    wtab = _phase_weight_table(weight, wo)                        # (2*Cin*6, lanes)
    brow = jnp.repeat(bias.astype(jnp.float32), wo)[None, :]      # (1, lanes)

    # Free (contiguous) reshape so the kernel can issue one batched expansion
    # matmul per column tap instead of per-channel K=16 matmuls.
    x2d = x.reshape(n, c * h, w)

    grid_spec = pltpu.PrefetchScalarGridSpec(
        num_scalar_prefetch=0,
        grid=(n // bb,),
        in_specs=[
            pl.BlockSpec((bb, c * h, w), lambda g: (g, 0, 0)),
            pl.BlockSpec((3 * w, lanes), lambda g: (0, 0)),
            pl.BlockSpec((ho, 2 * h), lambda g: (0, 0)),
            pl.BlockSpec((2 * cin * 6, lanes), lambda g: (0, 0)),
            pl.BlockSpec((1, lanes), lambda g: (0, 0)),
        ],
        out_specs=pl.BlockSpec((bb, cout, ho, wo), lambda g: (g, 0, 0, 0)),
        scratch_shapes=[pltpu.VMEM((3 * cin, h + 2, lanes), jnp.float32)],
    )
    return pl.pallas_call(
        _upsample_conv3x3_kernel,
        out_shape=jax.ShapeDtypeStruct((n, cout, ho, wo), x.dtype),
        grid_spec=grid_spec,
        compiler_params=pltpu.CompilerParams(dimension_semantics=("parallel",)),
    )(x2d, rmats, lcat, wtab, brow)


def _reference(x, weight, bias):
    """Plain-JAX reference (matches F.interpolate(nearest, x2) + Conv2d(3, pad=1))."""
    x_up = jnp.repeat(jnp.repeat(x, 2, axis=2), 2, axis=3)
    out = jax.lax.conv_general_dilated(
        x_up, weight, window_strides=(1, 1), padding=((1, 1), (1, 1)),
        dimension_numbers=("NCHW", "OIHW", "NCHW"))
    return out + bias[None, :, None, None]


if __name__ == "__main__":
    channels = 4
    out_channels = 4  # out_channels defaults to channels in the module

    key = jax.random.PRNGKey(0)
    kx, kw, kb = jax.random.split(key, 3)

    # Input (batch=2, channels=4, spatial=16x16), NCHW like PyTorch.
    x = jax.random.normal(kx, (2, channels, 16, 16), dtype=jnp.float32)

    # Deterministic Conv2d-style init (kaiming-uniform bound = 1/sqrt(fan_in)).
    fan_in = channels * 3 * 3
    bound = 1.0 / math.sqrt(fan_in)
    weight = jax.random.uniform(kw, (out_channels, channels, 3, 3),
                                jnp.float32, -bound, bound)
    bias = jax.random.uniform(kb, (out_channels,), jnp.float32, -bound, bound)

    out = upsample_forward(x, weight, bias, use_conv=True)
    out = jax.block_until_ready(out)

    assert out.shape == (2, out_channels, 32, 32)
    ref = _reference(x, weight, bias)
    assert jnp.allclose(out, ref, atol=1e-4, rtol=1e-4), \
        float(jnp.max(jnp.abs(out - ref)))
    print("KERNEL_OK")
</pallas_src>

<mosaic_0001>
module attributes {stable_mosaic.version = 11 : i64} {
  func.func @_upsample_conv3x3_kernel(%arg0: i32, %arg1: memref<1x64x16xf32, #tpu.memory_space<vmem>>, %arg2: memref<48x128xf32, #tpu.memory_space<vmem>>, %arg3: memref<32x32xf32, #tpu.memory_space<vmem>>, %arg4: memref<48x128xf32, #tpu.memory_space<vmem>>, %arg5: memref<1x128xf32, #tpu.memory_space<vmem>>, %arg6: memref<1x4x32x32xf32, #tpu.memory_space<vmem>>, %arg7: memref<12x18x128xf32, #tpu.memory_space<vmem>>) attributes {dimension_semantics = [#tpu.dimension_semantics<parallel>], iteration_bounds = array<i64: 2>, scalar_prefetch = 0 : i64, scratch_operands = 1 : i64, tpu.core_type = #tpu.core_type<tc>, window_params = [{transform_indices = @transform_0, window_bounds = array<i64: 1, 64, 16>}, {pipeline_mode = #tpu.pipeline_mode<synchronous>, transform_indices = @transform_1, window_bounds = array<i64: 48, 128>}, {pipeline_mode = #tpu.pipeline_mode<synchronous>, transform_indices = @transform_2, window_bounds = array<i64: 32, 32>}, {pipeline_mode = #tpu.pipeline_mode<synchronous>, transform_indices = @transform_3, window_bounds = array<i64: 48, 128>}, {pipeline_mode = #tpu.pipeline_mode<synchronous>, transform_indices = @transform_4, window_bounds = array<i64: 1, 128>}, {transform_indices = @transform_5, window_bounds = array<i64: 1, 4, 32, 32>}]} {
    %cst = arith.constant 0.000000e+00 : f32
    %0 = vector.broadcast %cst : f32 to vector<1x128xf32>
    %c0 = arith.constant 0 : index
    %c0_0 = arith.constant 0 : index
    %c0_1 = arith.constant 0 : index
    %1 = vector.load %arg7[%c0, %c0_0, %c0_1] : memref<12x18x128xf32, #tpu.memory_space<vmem>>, vector<1x1x128xf32>
    %2 = vector.shape_cast %1 : vector<1x1x128xf32> to vector<1x128xf32>
    %3 = vector.shape_cast %0 : vector<1x128xf32> to vector<1x1x128xf32>
    tpu.vector_store %arg7[%c0, %c0_0, %c0_1], %3 {strides = array<i32>} : memref<12x18x128xf32, #tpu.memory_space<vmem>>, vector<1x1x128xf32>,
    %c0_2 = arith.constant 0 : index
    %c17 = arith.constant 17 : index
    %c0_3 = arith.constant 0 : index
    %4 = vector.load %arg7[%c0_2, %c17, %c0_3] : memref<12x18x128xf32, #tpu.memory_space<vmem>>, vector<1x1x128xf32>
    %5 = vector.shape_cast %4 : vector<1x1x128xf32> to vector<1x128xf32>
    %6 = vector.shape_cast %0 : vector<1x128xf32> to vector<1x1x128xf32>
    tpu.vector_store %arg7[%c0_2, %c17, %c0_3], %6 {strides = array<i32>} : memref<12x18x128xf32, #tpu.memory_space<vmem>>, vector<1x1x128xf32>,
    %c1 = arith.constant 1 : index
    %c0_4 = arith.constant 0 : index
    %c0_5 = arith.constant 0 : index
    %7 = vector.load %arg7[%c1, %c0_4, %c0_5] : memref<12x18x128xf32, #tpu.memory_space<vmem>>, vector<1x1x128xf32>
    %8 = vector.shape_cast %7 : vector<1x1x128xf32> to vector<1x128xf32>
    %9 = vector.shape_cast %0 : vector<1x128xf32> to vector<1x1x128xf32>
    tpu.vector_store %arg7[%c1, %c0_4, %c0_5], %9 {strides = array<i32>} : memref<12x18x128xf32, #tpu.memory_space<vmem>>, vector<1x1x128xf32>,
    %c1_6 = arith.constant 1 : index
    %c17_7 = arith.constant 17 : index
    %c0_8 = arith.constant 0 : index
    %10 = vector.load %arg7[%c1_6, %c17_7, %c0_8] : memref<12x18x128xf32, #tpu.memory_space<vmem>>, vector<1x1x128xf32>
    %11 = vector.shape_cast %10 : vector<1x1x128xf32> to vector<1x128xf32>
    %12 = vector.shape_cast %0 : vector<1x128xf32> to vector<1x1x128xf32>
    tpu.vector_store %arg7[%c1_6, %c17_7, %c0_8], %12 {strides = array<i32>} : memref<12x18x128xf32, #tpu.memory_space<vmem>>, vector<1x1x128xf32>,
    %c2 = arith.constant 2 : index
    %c0_9 = arith.constant 0 : index
    %c0_10 = arith.constant 0 : index
    %13 = vector.load %arg7[%c2, %c0_9, %c0_10] : memref<12x18x128xf32, #tpu.memory_space<vmem>>, vector<1x1x128xf32>
    %14 = vector.shape_cast %13 : vector<1x1x128xf32> to vector<1x128xf32>
    %15 = vector.shape_cast %0 : vector<1x128xf32> to vector<1x1x128xf32>
    tpu.vector_store %arg7[%c2, %c0_9, %c0_10], %15 {strides = array<i32>} : memref<12x18x128xf32, #tpu.memory_space<vmem>>, vector<1x1x128xf32>,
    %c2_11 = arith.constant 2 : index
    %c17_12 = arith.constant 17 : index
    %c0_13 = arith.constant 0 : index
    %16 = vector.load %arg7[%c2_11, %c17_12, %c0_13] : memref<12x18x128xf32, #tpu.memory_space<vmem>>, vector<1x1x128xf32>
    %17 = vector.shape_cast %16 : vector<1x1x128xf32> to vector<1x128xf32>
    %18 = vector.shape_cast %0 : vector<1x128xf32> to vector<1x1x128xf32>
    tpu.vector_store %arg7[%c2_11, %c17_12, %c0_13], %18 {strides = array<i32>} : memref<12x18x128xf32, #tpu.memory_space<vmem>>, vector<1x1x128xf32>,
    %c3 = arith.constant 3 : index
    %c0_14 = arith.constant 0 : index
    %c0_15 = arith.constant 0 : index
    %19 = vector.load %arg7[%c3, %c0_14, %c0_15] : memref<12x18x128xf32, #tpu.memory_space<vmem>>, vector<1x1x128xf32>
    %20 = vector.shape_cast %19 : vector<1x1x128xf32> to vector<1x128xf32>
    %21 = vector.shape_cast %0 : vector<1x128xf32> to vector<1x1x128xf32>
    tpu.vector_store %arg7[%c3, %c0_14, %c0_15], %21 {strides = array<i32>} : memref<12x18x128xf32, #tpu.memory_space<vmem>>, vector<1x1x128xf32>,
    %c3_16 = arith.constant 3 : index
    %c17_17 = arith.constant 17 : index
    %c0_18 = arith.constant 0 : index
    %22 = vector.load %arg7[%c3_16, %c17_17, %c0_18] : memref<12x18x128xf32, #tpu.memory_space<vmem>>, vector<1x1x128xf32>
    %23 = vector.shape_cast %22 : vector<1x1x128xf32> to vector<1x128xf32>
    %24 = vector.shape_cast %0 : vector<1x128xf32> to vector<1x1x128xf32>
    tpu.vector_store %arg7[%c3_16, %c17_17, %c0_18], %24 {strides = array<i32>} : memref<12x18x128xf32, #tpu.memory_space<vmem>>, vector<1x1x128xf32>,
    %c4 = arith.constant 4 : index
    %c0_19 = arith.constant 0 : index
    %c0_20 = arith.constant 0 : index
    %25 = vector.load %arg7[%c4, %c0_19, %c0_20] : memref<12x18x128xf32, #tpu.memory_space<vmem>>, vector<1x1x128xf32>
    %26 = vector.shape_cast %25 : vector<1x1x128xf32> to vector<1x128xf32>
    %27 = vector.shape_cast %0 : vector<1x128xf32> to vector<1x1x128xf32>
    tpu.vector_store %arg7[%c4, %c0_19, %c0_20], %27 {strides = array<i32>} : memref<12x18x128xf32, #tpu.memory_space<vmem>>, vector<1x1x128xf32>,
    %c4_21 = arith.constant 4 : index
    %c17_22 = arith.constant 17 : index
    %c0_23 = arith.constant 0 : index
    %28 = vector.load %arg7[%c4_21, %c17_22, %c0_23] : memref<12x18x128xf32, #tpu.memory_space<vmem>>, vector<1x1x128xf32>
    %29 = vector.shape_cast %28 : vector<1x1x128xf32> to vector<1x128xf32>
    %30 = vector.shape_cast %0 : vector<1x128xf32> to vector<1x1x128xf32>
    tpu.vector_store %arg7[%c4_21, %c17_22, %c0_23], %30 {strides = array<i32>} : memref<12x18x128xf32, #tpu.memory_space<vmem>>, vector<1x1x128xf32>,
    %c5 = arith.constant 5 : index
    %c0_24 = arith.constant 0 : index
    %c0_25 = arith.constant 0 : index
    %31 = vector.load %arg7[%c5, %c0_24, %c0_25] : memref<12x18x128xf32, #tpu.memory_space<vmem>>, vector<1x1x128xf32>
    %32 = vector.shape_cast %31 : vector<1x1x128xf32> to vector<1x128xf32>
    %33 = vector.shape_cast %0 : vector<1x128xf32> to vector<1x1x128xf32>
    tpu.vector_store %arg7[%c5, %c0_24, %c0_25], %33 {strides = array<i32>} : memref<12x18x128xf32, #tpu.memory_space<vmem>>, vector<1x1x128xf32>,
    %c5_26 = arith.constant 5 : index
    %c17_27 = arith.constant 17 : index
    %c0_28 = arith.constant 0 : index
    %34 = vector.load %arg7[%c5_26, %c17_27, %c0_28] : memref<12x18x128xf32, #tpu.memory_space<vmem>>, vector<1x1x128xf32>
    %35 = vector.shape_cast %34 : vector<1x1x128xf32> to vector<1x128xf32>
    %36 = vector.shape_cast %0 : vector<1x128xf32> to vector<1x1x128xf32>
    tpu.vector_store %arg7[%c5_26, %c17_27, %c0_28], %36 {strides = array<i32>} : memref<12x18x128xf32, #tpu.memory_space<vmem>>, vector<1x1x128xf32>,
    %c6 = arith.constant 6 : index
    %c0_29 = arith.constant 0 : index
    %c0_30 = arith.constant 0 : index
    %37 = vector.load %arg7[%c6, %c0_29, %c0_30] : memref<12x18x128xf32, #tpu.memory_space<vmem>>, vector<1x1x128xf32>
    %38 = vector.shape_cast %37 : vector<1x1x128xf32> to vector<1x128xf32>
    %39 = vector.shape_cast %0 : vector<1x128xf32> to vector<1x1x128xf32>
    tpu.vector_store %arg7[%c6, %c0_29, %c0_30], %39 {strides = array<i32>} : memref<12x18x128xf32, #tpu.memory_space<vmem>>, vector<1x1x128xf32>,
    %c6_31 = arith.constant 6 : index
    %c17_32 = arith.constant 17 : index
    %c0_33 = arith.constant 0 : index
    %40 = vector.load %arg7[%c6_31, %c17_32, %c0_33] : memref<12x18x128xf32, #tpu.memory_space<vmem>>, vector<1x1x128xf32>
    %41 = vector.shape_cast %40 : vector<1x1x128xf32> to vector<1x128xf32>
    %42 = vector.shape_cast %0 : vector<1x128xf32> to vector<1x1x128xf32>
    tpu.vector_store %arg7[%c6_31, %c17_32, %c0_33], %42 {strides = array<i32>} : memref<12x18x128xf32, #tpu.memory_space<vmem>>, vector<1x1x128xf32>,
    %c7 = arith.constant 7 : index
    %c0_34 = arith.constant 0 : index
    %c0_35 = arith.constant 0 : index
    %43 = vector.load %arg7[%c7, %c0_34, %c0_35] : memref<12x18x128xf32, #tpu.memory_space<vmem>>, vector<1x1x128xf32>
    %44 = vector.shape_cast %43 : vector<1x1x128xf32> to vector<1x128xf32>
    %45 = vector.shape_cast %0 : vector<1x128xf32> to vector<1x1x128xf32>
    tpu.vector_store %arg7[%c7, %c0_34, %c0_35], %45 {strides = array<i32>} : memref<12x18x128xf32, #tpu.memory_space<vmem>>, vector<1x1x128xf32>,
    %c7_36 = arith.constant 7 : index
    %c17_37 = arith.constant 17 : index
    %c0_38 = arith.constant 0 : index
    %46 = vector.load %arg7[%c7_36, %c17_37, %c0_38] : memref<12x18x128xf32, #tpu.memory_space<vmem>>, vector<1x1x128xf32>
    %47 = vector.shape_cast %46 : vector<1x1x128xf32> to vector<1x128xf32>
    %48 = vector.shape_cast %0 : vector<1x128xf32> to vector<1x1x128xf32>
    tpu.vector_store %arg7[%c7_36, %c17_37, %c0_38], %48 {strides = array<i32>} : memref<12x18x128xf32, #tpu.memory_space<vmem>>, vector<1x1x128xf32>,
    %c8 = arith.constant 8 : index
    %c0_39 = arith.constant 0 : index
    %c0_40 = arith.constant 0 : index
    %49 = vector.load %arg7[%c8, %c0_39, %c0_40] : memref<12x18x128xf32, #tpu.memory_space<vmem>>, vector<1x1x128xf32>
    %50 = vector.shape_cast %49 : vector<1x1x128xf32> to vector<1x128xf32>
    %51 = vector.shape_cast %0 : vector<1x128xf32> to vector<1x1x128xf32>
    tpu.vector_store %arg7[%c8, %c0_39, %c0_40], %51 {strides = array<i32>} : memref<12x18x128xf32, #tpu.memory_space<vmem>>, vector<1x1x128xf32>,
    %c8_41 = arith.constant 8 : index
    %c17_42 = arith.constant 17 : index
    %c0_43 = arith.constant 0 : index
    %52 = vector.load %arg7[%c8_41, %c17_42, %c0_43] : memref<12x18x128xf32, #tpu.memory_space<vmem>>, vector<1x1x128xf32>
    %53 = vector.shape_cast %52 : vector<1x1x128xf32> to vector<1x128xf32>
    %54 = vector.shape_cast %0 : vector<1x128xf32> to vector<1x1x128xf32>
    tpu.vector_store %arg7[%c8_41, %c17_42, %c0_43], %54 {strides = array<i32>} : memref<12x18x128xf32, #tpu.memory_space<vmem>>, vector<1x1x128xf32>,
    %c9 = arith.constant 9 : index
    %c0_44 = arith.constant 0 : index
    %c0_45 = arith.constant 0 : index
    %55 = vector.load %arg7[%c9, %c0_44, %c0_45] : memref<12x18x128xf32, #tpu.memory_space<vmem>>, vector<1x1x128xf32>
    %56 = vector.shape_cast %55 : vector<1x1x128xf32> to vector<1x128xf32>
    %57 = vector.shape_cast %0 : vector<1x128xf32> to vector<1x1x128xf32>
    tpu.vector_store %arg7[%c9, %c0_44, %c0_45], %57 {strides = array<i32>} : memref<12x18x128xf32, #tpu.memory_space<vmem>>, vector<1x1x128xf32>,
    %c9_46 = arith.constant 9 : index
    %c17_47 = arith.constant 17 : index
    %c0_48 = arith.constant 0 : index
    %58 = vector.load %arg7[%c9_46, %c17_47, %c0_48] : memref<12x18x128xf32, #tpu.memory_space<vmem>>, vector<1x1x128xf32>
    %59 = vector.shape_cast %58 : vector<1x1x128xf32> to vector<1x128xf32>
    %60 = vector.shape_cast %0 : vector<1x128xf32> to vector<1x1x128xf32>
    tpu.vector_store %arg7[%c9_46, %c17_47, %c0_48], %60 {strides = array<i32>} : memref<12x18x128xf32, #tpu.memory_space<vmem>>, vector<1x1x128xf32>,
    %c10 = arith.constant 10 : index
    %c0_49 = arith.constant 0 : index
    %c0_50 = arith.constant 0 : index
    %61 = vector.load %arg7[%c10, %c0_49, %c0_50] : memref<12x18x128xf32, #tpu.memory_space<vmem>>, vector<1x1x128xf32>
    %62 = vector.shape_cast %61 : vector<1x1x128xf32> to vector<1x128xf32>
    %63 = vector.shape_cast %0 : vector<1x128xf32> to vector<1x1x128xf32>
    tpu.vector_store %arg7[%c10, %c0_49, %c0_50], %63 {strides = array<i32>} : memref<12x18x128xf32, #tpu.memory_space<vmem>>, vector<1x1x128xf32>,
    %c10_51 = arith.constant 10 : index
    %c17_52 = arith.constant 17 : index
    %c0_53 = arith.constant 0 : index
    %64 = vector.load %arg7[%c10_51, %c17_52, %c0_53] : memref<12x18x128xf32, #tpu.memory_space<vmem>>, vector<1x1x128xf32>
    %65 = vector.shape_cast %64 : vector<1x1x128xf32> to vector<1x128xf32>
    %66 = vector.shape_cast %0 : vector<1x128xf32> to vector<1x1x128xf32>
    tpu.vector_store %arg7[%c10_51, %c17_52, %c0_53], %66 {strides = array<i32>} : memref<12x18x128xf32, #tpu.memory_space<vmem>>, vector<1x1x128xf32>,
    %c11 = arith.constant 11 : index
    %c0_54 = arith.constant 0 : index
    %c0_55 = arith.constant 0 : index
    %67 = vector.load %arg7[%c11, %c0_54, %c0_55] : memref<12x18x128xf32, #tpu.memory_space<vmem>>, vector<1x1x128xf32>
    %68 = vector.shape_cast %67 : vector<1x1x128xf32> to vector<1x128xf32>
    %69 = vector.shape_cast %0 : vector<1x128xf32> to vector<1x1x128xf32>
    tpu.vector_store %arg7[%c11, %c0_54, %c0_55], %69 {strides = array<i32>} : memref<12x18x128xf32, #tpu.memory_space<vmem>>, vector<1x1x128xf32>,
    %c11_56 = arith.constant 11 : index
    %c17_57 = arith.constant 17 : index
    %c0_58 = arith.constant 0 : index
    %70 = vector.load %arg7[%c11_56, %c17_57, %c0_58] : memref<12x18x128xf32, #tpu.memory_space<vmem>>, vector<1x1x128xf32>
    %71 = vector.shape_cast %70 : vector<1x1x128xf32> to vector<1x128xf32>
    %72 = vector.shape_cast %0 : vector<1x128xf32> to vector<1x1x128xf32>
    tpu.vector_store %arg7[%c11_56, %c17_57, %c0_58], %72 {strides = array<i32>} : memref<12x18x128xf32, #tpu.memory_space<vmem>>, vector<1x1x128xf32>,
    %c0_59 = arith.constant 0 : index
    %c0_60 = arith.constant 0 : index
    %73 = vector.load %arg5[%c0_59, %c0_60] : memref<1x128xf32, #tpu.memory_space<vmem>>, vector<1x128xf32>
    %74 = vector.shape_cast %73 : vector<1x128xf32> to vector<1x128xf32>
    %75 = vector.broadcast %74 : vector<1x128xf32> to vector<16x128xf32>
    %c0_61 = arith.constant 0 : index
    %c0_62 = arith.constant 0 : index
    %76 = vector.load %arg3[%c0_61, %c0_62] : memref<32x32xf32, #tpu.memory_space<vmem>>, vector<32x32xf32>
    %c0_63 = arith.constant 0 : index
    %c0_64 = arith.constant 0 : index
    %c0_65 = arith.constant 0 : index
    %77 = vector.load %arg1[%c0_63, %c0_64, %c0_65] : memref<1x64x16xf32, #tpu.memory_space<vmem>>, vector<1x64x16xf32>
    %78 = vector.shape_cast %77 : vector<1x64x16xf32> to vector<64x16xf32>
    %c0_66 = arith.constant 0 : index
    %c0_67 = arith.constant 0 : index
    %79 = vector.load %arg2[%c0_66, %c0_67] : memref<48x128xf32, #tpu.memory_space<vmem>>, vector<16x128xf32>
    %cst_68 = arith.constant dense<0.000000e+00> : vector<64x128xf32>
    %80 = tpu.matmul %78, %79, %cst_68 {dimension_numbers = #tpu.dot_dimension_numbers<[1], [0], [0], [1], [0, 0, 1, 1], [], []>} : vector<64x16xf32>, vector<16x128xf32>, vector<64x128xf32> -> vector<64x128xf32>
    %81 = vector.extract_strided_slice %80 {offsets = [0, 0], sizes = [16, 128], strides = [1, 1]} : vector<64x128xf32> to vector<16x128xf32>
    %c0_69 = arith.constant 0 : index
    %c1_70 = arith.constant 1 : index
    %c0_71 = arith.constant 0 : index
    %82 = vector.load %arg7[%c0_69, %c1_70, %c0_71] : memref<12x18x128xf32, #tpu.memory_space<vmem>>, vector<1x16x128xf32>
    %83 = vector.shape_cast %82 : vector<1x16x128xf32> to vector<16x128xf32>
    %84 = vector.shape_cast %81 : vector<16x128xf32> to vector<1x16x128xf32>
    tpu.vector_store %arg7[%c0_69, %c1_70, %c0_71], %84 {strides = array<i32>} : memref<12x18x128xf32, #tpu.memory_space<vmem>>, vector<1x16x128xf32>,
    %85 = vector.extract_strided_slice %80 {offsets = [16, 0], sizes = [16, 128], strides = [1, 1]} : vector<64x128xf32> to vector<16x128xf32>
    %c1_72 = arith.constant 1 : index
    %c1_73 = arith.constant 1 : index
    %c0_74 = arith.constant 0 : index
    %86 = vector.load %arg7[%c1_72, %c1_73, %c0_74] : memref<12x18x128xf32, #tpu.memory_space<vmem>>, vector<1x16x128xf32>
    %87 = vector.shape_cast %86 : vector<1x16x128xf32> to vector<16x128xf32>
    %88 = vector.shape_cast %85 : vector<16x128xf32> to vector<1x16x128xf32>
    tpu.vector_store %arg7[%c1_72, %c1_73, %c0_74], %88 {strides = array<i32>} : memref<12x18x128xf32, #tpu.memory_space<vmem>>, vector<1x16x128xf32>,
    %89 = vector.extract_strided_slice %80 {offsets = [32, 0], sizes = [16, 128], strides = [1, 1]} : vector<64x128xf32> to vector<16x128xf32>
    %c2_75 = arith.constant 2 : index
    %c1_76 = arith.constant 1 : index
    %c0_77 = arith.constant 0 : index
    %90 = vector.load %arg7[%c2_75, %c1_76, %c0_77] : memref<12x18x128xf32, #tpu.memory_space<vmem>>, vector<1x16x128xf32>
    %91 = vector.shape_cast %90 : vector<1x16x128xf32> to vector<16x128xf32>
    %92 = vector.shape_cast %89 : vector<16x128xf32> to vector<1x16x128xf32>
    tpu.vector_store %arg7[%c2_75, %c1_76, %c0_77], %92 {strides = array<i32>} : memref<12x18x128xf32, #tpu.memory_space<vmem>>, vector<1x16x128xf32>,
    %93 = vector.extract_strided_slice %80 {offsets = [48, 0], sizes = [16, 128], strides = [1, 1]} : vector<64x128xf32> to vector<16x128xf32>
    %c3_78 = arith.constant 3 : index
    %c1_79 = arith.constant 1 : index
    %c0_80 = arith.constant 0 : index
    %94 = vector.load %arg7[%c3_78, %c1_79, %c0_80] : memref<12x18x128xf32, #tpu.memory_space<vmem>>, vector<1x16x128xf32>
    %95 = vector.shape_cast %94 : vector<1x16x128xf32> to vector<16x128xf32>
    %96 = vector.shape_cast %93 : vector<16x128xf32> to vector<1x16x128xf32>
    tpu.vector_store %arg7[%c3_78, %c1_79, %c0_80], %96 {strides = array<i32>} : memref<12x18x128xf32, #tpu.memory_space<vmem>>, vector<1x16x128xf32>,
    %c16 = arith.constant 16 : index
    %c0_81 = arith.constant 0 : index
    %97 = vector.load %arg2[%c16, %c0_81] : memref<48x128xf32, #tpu.memory_space<vmem>>, vector<16x128xf32>
    %cst_82 = arith.constant dense<0.000000e+00> : vector<64x128xf32>
    %98 = tpu.matmul %78, %97, %cst_82 {dimension_numbers = #tpu.dot_dimension_numbers<[1], [0], [0], [1], [0, 0, 1, 1], [], []>} : vector<64x16xf32>, vector<16x128xf32>, vector<64x128xf32> -> vector<64x128xf32>
    %99 = vector.extract_strided_slice %98 {offsets = [0, 0], sizes = [16, 128], strides = [1, 1]} : vector<64x128xf32> to vector<16x128xf32>
    %c4_83 = arith.constant 4 : index
    %c1_84 = arith.constant 1 : index
    %c0_85 = arith.constant 0 : index
    %100 = vector.load %arg7[%c4_83, %c1_84, %c0_85] : memref<12x18x128xf32, #tpu.memory_space<vmem>>, vector<1x16x128xf32>
    %101 = vector.shape_cast %100 : vector<1x16x128xf32> to vector<16x128xf32>
    %102 = vector.shape_cast %99 : vector<16x128xf32> to vector<1x16x128xf32>
    tpu.vector_store %arg7[%c4_83, %c1_84, %c0_85], %102 {strides = array<i32>} : memref<12x18x128xf32, #tpu.memory_space<vmem>>, vector<1x16x128xf32>,
    %103 = vector.extract_strided_slice %98 {offsets = [16, 0], sizes = [16, 128], strides = [1, 1]} : vector<64x128xf32> to vector<16x128xf32>
    %c5_86 = arith.constant 5 : index
    %c1_87 = arith.constant 1 : index
    %c0_88 = arith.constant 0 : index
    %104 = vector.load %arg7[%c5_86, %c1_87, %c0_88] : memref<12x18x128xf32, #tpu.memory_space<vmem>>, vector<1x16x128xf32>
    %105 = vector.shape_cast %104 : vector<1x16x128xf32> to vector<16x128xf32>
    %106 = vector.shape_cast %103 : vector<16x128xf32> to vector<1x16x128xf32>
    tpu.vector_store %arg7[%c5_86, %c1_87, %c0_88], %106 {strides = array<i32>} : memref<12x18x128xf32, #tpu.memory_space<vmem>>, vector<1x16x128xf32>,
    %107 = vector.extract_strided_slice %98 {offsets = [32, 0], sizes = [16, 128], strides = [1, 1]} : vector<64x128xf32> to vector<16x128xf32>
    %c6_89 = arith.constant 6 : index
    %c1_90 = arith.constant 1 : index
    %c0_91 = arith.constant 0 : index
    %108 = vector.load %arg7[%c6_89, %c1_90, %c0_91] : memref<12x18x128xf32, #tpu.memory_space<vmem>>, vector<1x16x128xf32>
    %109 = vector.shape_cast %108 : vector<1x16x128xf32> to vector<16x128xf32>
    %110 = vector.shape_cast %107 : vector<16x128xf32> to vector<1x16x128xf32>
    tpu.vector_store %arg7[%c6_89, %c1_90, %c0_91], %110 {strides = array<i32>} : memref<12x18x128xf32, #tpu.memory_space<vmem>>, vector<1x16x128xf32>,
    %111 = vector.extract_strided_slice %98 {offsets = [48, 0], sizes = [16, 128], strides = [1, 1]} : vector<64x128xf32> to vector<16x128xf32>
    %c7_92 = arith.constant 7 : index
    %c1_93 = arith.constant 1 : index
    %c0_94 = arith.constant 0 : index
    %112 = vector.load %arg7[%c7_92, %c1_93, %c0_94] : memref<12x18x128xf32, #tpu.memory_space<vmem>>, vector<1x16x128xf32>
    %113 = vector.shape_cast %112 : vector<1x16x128xf32> to vector<16x128xf32>
    %114 = vector.shape_cast %111 : vector<16x128xf32> to vector<1x16x128xf32>
    tpu.vector_store %arg7[%c7_92, %c1_93, %c0_94], %114 {strides = array<i32>} : memref<12x18x128xf32, #tpu.memory_space<vmem>>, vector<1x16x128xf32>,
    %c32 = arith.constant 32 : index
    %c0_95 = arith.constant 0 : index
    %115 = vector.load %arg2[%c32, %c0_95] : memref<48x128xf32, #tpu.memory_space<vmem>>, vector<16x128xf32>
    %cst_96 = arith.constant dense<0.000000e+00> : vector<64x128xf32>
    %116 = tpu.matmul %78, %115, %cst_96 {dimension_numbers = #tpu.dot_dimension_numbers<[1], [0], [0], [1], [0, 0, 1, 1], [], []>} : vector<64x16xf32>, vector<16x128xf32>, vector<64x128xf32> -> vector<64x128xf32>
    %117 = vector.extract_strided_slice %116 {offsets = [0, 0], sizes = [16, 128], strides = [1, 1]} : vector<64x128xf32> to vector<16x128xf32>
    %c8_97 = arith.constant 8 : index
    %c1_98 = arith.constant 1 : index
    %c0_99 = arith.constant 0 : index
    %118 = vector.load %arg7[%c8_97, %c1_98, %c0_99] : memref<12x18x128xf32, #tpu.memory_space<vmem>>, vector<1x16x128xf32>
    %119 = vector.shape_cast %118 : vector<1x16x128xf32> to vector<16x128xf32>
    %120 = vector.shape_cast %117 : vector<16x128xf32> to vector<1x16x128xf32>
    tpu.vector_store %arg7[%c8_97, %c1_98, %c0_99], %120 {strides = array<i32>} : memref<12x18x128xf32, #tpu.memory_space<vmem>>, vector<1x16x128xf32>,
    %121 = vector.extract_strided_slice %116 {offsets = [16, 0], sizes = [16, 128], strides = [1, 1]} : vector<64x128xf32> to vector<16x128xf32>
    %c9_100 = arith.constant 9 : index
    %c1_101 = arith.constant 1 : index
    %c0_102 = arith.constant 0 : index
    %122 = vector.load %arg7[%c9_100, %c1_101, %c0_102] : memref<12x18x128xf32, #tpu.memory_space<vmem>>, vector<1x16x128xf32>
    %123 = vector.shape_cast %122 : vector<1x16x128xf32> to vector<16x128xf32>
    %124 = vector.shape_cast %121 : vector<16x128xf32> to vector<1x16x128xf32>
    tpu.vector_store %arg7[%c9_100, %c1_101, %c0_102], %124 {strides = array<i32>} : memref<12x18x128xf32, #tpu.memory_space<vmem>>, vector<1x16x128xf32>,
    %125 = vector.extract_strided_slice %116 {offsets = [32, 0], sizes = [16, 128], strides = [1, 1]} : vector<64x128xf32> to vector<16x128xf32>
    %c10_103 = arith.constant 10 : index
    %c1_104 = arith.constant 1 : index
    %c0_105 = arith.constant 0 : index
    %126 = vector.load %arg7[%c10_103, %c1_104, %c0_105] : memref<12x18x128xf32, #tpu.memory_space<vmem>>, vector<1x16x128xf32>
    %127 = vector.shape_cast %126 : vector<1x16x128xf32> to vector<16x128xf32>
    %128 = vector.shape_cast %125 : vector<16x128xf32> to vector<1x16x128xf32>
    tpu.vector_store %arg7[%c10_103, %c1_104, %c0_105], %128 {strides = array<i32>} : memref<12x18x128xf32, #tpu.memory_space<vmem>>, vector<1x16x128xf32>,
    %129 = vector.extract_strided_slice %116 {offsets = [48, 0], sizes = [16, 128], strides = [1, 1]} : vector<64x128xf32> to vector<16x128xf32>
    %c11_106 = arith.constant 11 : index
    %c1_107 = arith.constant 1 : index
    %c0_108 = arith.constant 0 : index
    %130 = vector.load %arg7[%c11_106, %c1_107, %c0_108] : memref<12x18x128xf32, #tpu.memory_space<vmem>>, vector<1x16x128xf32>
    %131 = vector.shape_cast %130 : vector<1x16x128xf32> to vector<16x128xf32>
    %132 = vector.shape_cast %129 : vector<16x128xf32> to vector<1x16x128xf32>
    tpu.vector_store %arg7[%c11_106, %c1_107, %c0_108], %132 {strides = array<i32>} : memref<12x18x128xf32, #tpu.memory_space<vmem>>, vector<1x16x128xf32>,
    %c0_109 = arith.constant 0 : index
    %c0_110 = arith.constant 0 : index
    %c0_111 = arith.constant 0 : index
    %133 = vector.load %arg7[%c0_109, %c0_110, %c0_111] : memref<12x18x128xf32, #tpu.memory_space<vmem>>, vector<1x16x128xf32>
    %134 = vector.shape_cast %133 : vector<1x16x128xf32> to vector<16x128xf32>
    %c0_112 = arith.constant 0 : index
    %c1_113 = arith.constant 1 : index
    %c0_114 = arith.constant 0 : index
    %135 = vector.load %arg7[%c0_112, %c1_113, %c0_114] : memref<12x18x128xf32, #tpu.memory_space<vmem>>, vector<1x16x128xf32>
    %136 = vector.shape_cast %135 : vector<1x16x128xf32> to vector<16x128xf32>
    %c0_115 = arith.constant 0 : index
    %c2_116 = arith.constant 2 : index
    %c0_117 = arith.constant 0 : index
    %137 = vector.load %arg7[%c0_115, %c2_116, %c0_117] : memref<12x18x128xf32, #tpu.memory_space<vmem>>, vector<1x16x128xf32>
    %138 = vector.shape_cast %137 : vector<1x16x128xf32> to vector<16x128xf32>
    %c0_118 = arith.constant 0 : index
    %c0_119 = arith.constant 0 : index
    %139 = vector.load %arg4[%c0_118, %c0_119] : memref<48x128xf32, #tpu.memory_space<vmem>>, vector<1x128xf32>
    %140 = vector.broadcast %139 : vector<1x128xf32> to vector<16x128xf32>
    %141 = arith.mulf %134, %140 : vector<16x128xf32>
    %142 = arith.addf %75, %141 : vector<16x128xf32>
    %c3_120 = arith.constant 3 : index
    %c0_121 = arith.constant 0 : index
    %143 = vector.load %arg4[%c3_120, %c0_121] : memref<48x128xf32, #tpu.memory_space<vmem>>, vector<1x128xf32>
    %144 = vector.broadcast %143 : vector<1x128xf32> to vector<16x128xf32>
    %145 = arith.mulf %136, %144 : vector<16x128xf32>
    %146 = arith.addf %142, %145 : vector<16x128xf32>
    %c24 = arith.constant 24 : index
    %c0_122 = arith.constant 0 : index
    %147 = vector.load %arg4[%c24, %c0_122] : memref<48x128xf32, #tpu.memory_space<vmem>>, vector<1x128xf32>
    %148 = vector.broadcast %147 : vector<1x128xf32> to vector<16x128xf32>
    %149 = arith.mulf %136, %148 : vector<16x128xf32>
    %150 = arith.addf %75, %149 : vector<16x128xf32>
    %c27 = arith.constant 27 : index
    %c0_123 = arith.constant 0 : index
    %151 = vector.load %arg4[%c27, %c0_123] : memref<48x128xf32, #tpu.memory_space<vmem>>, vector<1x128xf32>
    %152 = vector.broadcast %151 : vector<1x128xf32> to vector<16x128xf32>
    %153 = arith.mulf %138, %152 : vector<16x128xf32>
    %154 = arith.addf %150, %153 : vector<16x128xf32>
    %c4_124 = arith.constant 4 : index
    %c0_125 = arith.constant 0 : index
    %c0_126 = arith.constant 0 : index
    %155 = vector.load %arg7[%c4_124, %c0_125, %c0_126] : memref<12x18x128xf32, #tpu.memory_space<vmem>>, vector<1x16x128xf32>
    %156 = vector.shape_cast %155 : vector<1x16x128xf32> to vector<16x128xf32>
    %c4_127 = arith.constant 4 : index
    %c1_128 = arith.constant 1 : index
    %c0_129 = arith.constant 0 : index
    %157 = vector.load %arg7[%c4_127, %c1_128, %c0_129] : memref<12x18x128xf32, #tpu.memory_space<vmem>>, vector<1x16x128xf32>
    %158 = vector.shape_cast %157 : vector<1x16x128xf32> to vector<16x128xf32>
    %c4_130 = arith.constant 4 : index
    %c2_131 = arith.constant 2 : index
    %c0_132 = arith.constant 0 : index
    %159 = vector.load %arg7[%c4_130, %c2_131, %c0_132] : memref<12x18x128xf32, #tpu.memory_space<vmem>>, vector<1x16x128xf32>
    %160 = vector.shape_cast %159 : vector<1x16x128xf32> to vector<16x128xf32>
    %c1_133 = arith.constant 1 : index
    %c0_134 = arith.constant 0 : index
    %161 = vector.load %arg4[%c1_133, %c0_134] : memref<48x128xf32, #tpu.memory_space<vmem>>, vector<1x128xf32>
    %162 = vector.broadcast %161 : vector<1x128xf32> to vector<16x128xf32>
    %163 = arith.mulf %156, %162 : vector<16x128xf32>
    %164 = arith.addf %146, %163 : vector<16x128xf32>
    %c4_135 = arith.constant 4 : index
    %c0_136 = arith.constant 0 : index
    %165 = vector.load %arg4[%c4_135, %c0_136] : memref<48x128xf32, #tpu.memory_space<vmem>>, vector<1x128xf32>
    %166 = vector.broadcast %165 : vector<1x128xf32> to vector<16x128xf32>
    %167 = arith.mulf %158, %166 : vector<16x128xf32>
    %168 = arith.addf %164, %167 : vector<16x128xf32>
    %c25 = arith.constant 25 : index
    %c0_137 = arith.constant 0 : index
    %169 = vector.load %arg4[%c25, %c0_137] : memref<48x128xf32, #tpu.memory_space<vmem>>, vector<1x128xf32>
    %170 = vector.broadcast %169 : vector<1x128xf32> to vector<16x128xf32>
    %171 = arith.mulf %158, %170 : vector<16x128xf32>
    %172 = arith.addf %154, %171 : vector<16x128xf32>
    %c28 = arith.constant 28 : index
    %c0_138 = arith.constant 0 : index
    %173 = vector.load %arg4[%c28, %c0_138] : memref<48x128xf32, #tpu.memory_space<vmem>>, vector<1x128xf32>
    %174 = vector.broadcast %173 : vector<1x128xf32> to vector<16x128xf32>
    %175 = arith.mulf %160, %174 : vector<16x128xf32>
    %176 = arith.addf %172, %175 : vector<16x128xf32>
    %c8_139 = arith.constant 8 : index
    %c0_140 = arith.constant 0 : index
    %c0_141 = arith.constant 0 : index
    %177 = vector.load %arg7[%c8_139, %c0_140, %c0_141] : memref<12x18x128xf32, #tpu.memory_space<vmem>>, vector<1x16x128xf32>
    %178 = vector.shape_cast %177 : vector<1x16x128xf32> to vector<16x128xf32>
    %c8_142 = arith.constant 8 : index
    %c1_143 = arith.constant 1 : index
    %c0_144 = arith.constant 0 : index
    %179 = vector.load %arg7[%c8_142, %c1_143, %c0_144] : memref<12x18x128xf32, #tpu.memory_space<vmem>>, vector<1x16x128xf32>
    %180 = vector.shape_cast %179 : vector<1x16x128xf32> to vector<16x128xf32>
    %c8_145 = arith.constant 8 : index
    %c2_146 = arith.constant 2 : index
    %c0_147 = arith.constant 0 : index
    %181 = vector.load %arg7[%c8_145, %c2_146, %c0_147] : memref<12x18x128xf32, #tpu.memory_space<vmem>>, vector<1x16x128xf32>
    %182 = vector.shape_cast %181 : vector<1x16x128xf32> to vector<16x128xf32>
    %c2_148 = arith.constant 2 : index
    %c0_149 = arith.constant 0 : index
    %183 = vector.load %arg4[%c2_148, %c0_149] : memref<48x128xf32, #tpu.memory_space<vmem>>, vector<1x128xf32>
    %184 = vector.broadcast %183 : vector<1x128xf32> to vector<16x128xf32>
    %185 = arith.mulf %178, %184 : vector<16x128xf32>
    %186 = arith.addf %168, %185 : vector<16x128xf32>
    %c5_150 = arith.constant 5 : index
    %c0_151 = arith.constant 0 : index
    %187 = vector.load %arg4[%c5_150, %c0_151] : memref<48x128xf32, #tpu.memory_space<vmem>>, vector<1x128xf32>
    %188 = vector.broadcast %187 : vector<1x128xf32> to vector<16x128xf32>
    %189 = arith.mulf %180, %188 : vector<16x128xf32>
    %190 = arith.addf %186, %189 : vector<16x128xf32>
    %c26 = arith.constant 26 : index
    %c0_152 = arith.constant 0 : index
    %191 = vector.load %arg4[%c26, %c0_152] : memref<48x128xf32, #tpu.memory_space<vmem>>, vector<1x128xf32>
    %192 = vector.broadcast %191 : vector<1x128xf32> to vector<16x128xf32>
    %193 = arith.mulf %180, %192 : vector<16x128xf32>
    %194 = arith.addf %176, %193 : vector<16x128xf32>
    %c29 = arith.constant 29 : index
    %c0_153 = arith.constant 0 : index
    %195 = vector.load %arg4[%c29, %c0_153] : memref<48x128xf32, #tpu.memory_space<vmem>>, vector<1x128xf32>
    %196 = vector.broadcast %195 : vector<1x128xf32> to vector<16x128xf32>
    %197 = arith.mulf %182, %196 : vector<16x128xf32>
    %198 = arith.addf %194, %197 : vector<16x128xf32>
    %c1_154 = arith.constant 1 : index
    %c0_155 = arith.constant 0 : index
    %c0_156 = arith.constant 0 : index
    %199 = vector.load %arg7[%c1_154, %c0_155, %c0_156] : memref<12x18x128xf32, #tpu.memory_space<vmem>>, vector<1x16x128xf32>
    %200 = vector.shape_cast %199 : vector<1x16x128xf32> to vector<16x128xf32>
    %c1_157 = arith.constant 1 : index
    %c1_158 = arith.constant 1 : index
    %c0_159 = arith.constant 0 : index
    %201 = vector.load %arg7[%c1_157, %c1_158, %c0_159] : memref<12x18x128xf32, #tpu.memory_space<vmem>>, vector<1x16x128xf32>
    %202 = vector.shape_cast %201 : vector<1x16x128xf32> to vector<16x128xf32>
    %c1_160 = arith.constant 1 : index
    %c2_161 = arith.constant 2 : index
    %c0_162 = arith.constant 0 : index
    %203 = vector.load %arg7[%c1_160, %c2_161, %c0_162] : memref<12x18x128xf32, #tpu.memory_space<vmem>>, vector<1x16x128xf32>
    %204 = vector.shape_cast %203 : vector<1x16x128xf32> to vector<16x128xf32>
    %c6_163 = arith.constant 6 : index
    %c0_164 = arith.constant 0 : index
    %205 = vector.load %arg4[%c6_163, %c0_164] : memref<48x128xf32, #tpu.memory_space<vmem>>, vector<1x128xf32>
    %206 = vector.broadcast %205 : vector<1x128xf32> to vector<16x128xf32>
    %207 = arith.mulf %200, %206 : vector<16x128xf32>
    %208 = arith.addf %190, %207 : vector<16x128xf32>
    %c9_165 = arith.constant 9 : index
    %c0_166 = arith.constant 0 : index
    %209 = vector.load %arg4[%c9_165, %c0_166] : memref<48x128xf32, #tpu.memory_space<vmem>>, vector<1x128xf32>
    %210 = vector.broadcast %209 : vector<1x128xf32> to vector<16x128xf32>
    %211 = arith.mulf %202, %210 : vector<16x128xf32>
    %212 = arith.addf %208, %211 : vector<16x128xf32>
    %c30 = arith.constant 30 : index
    %c0_167 = arith.constant 0 : index
    %213 = vector.load %arg4[%c30, %c0_167] : memref<48x128xf32, #tpu.memory_space<vmem>>, vector<1x128xf32>
    %214 = vector.broadcast %213 : vector<1x128xf32> to vector<16x128xf32>
    %215 = arith.mulf %202, %214 : vector<16x128xf32>
    %216 = arith.addf %198, %215 : vector<16x128xf32>
    %c33 = arith.constant 33 : index
    %c0_168 = arith.constant 0 : index
    %217 = vector.load %arg4[%c33, %c0_168] : memref<48x128xf32, #tpu.memory_space<vmem>>, vector<1x128xf32>
    %218 = vector.broadcast %217 : vector<1x128xf32> to vector<16x128xf32>
    %219 = arith.mulf %204, %218 : vector<16x128xf32>
    %220 = arith.addf %216, %219 : vector<16x128xf32>
    %c5_169 = arith.constant 5 : index
    %c0_170 = arith.constant 0 : index
    %c0_171 = arith.constant 0 : index
    %221 = vector.load %arg7[%c5_169, %c0_170, %c0_171] : memref<12x18x128xf32, #tpu.memory_space<vmem>>, vector<1x16x128xf32>
    %222 = vector.shape_cast %221 : vector<1x16x128xf32> to vector<16x128xf32>
    %c5_172 = arith.constant 5 : index
    %c1_173 = arith.constant 1 : index
    %c0_174 = arith.constant 0 : index
    %223 = vector.load %arg7[%c5_172, %c1_173, %c0_174] : memref<12x18x128xf32, #tpu.memory_space<vmem>>, vector<1x16x128xf32>
    %224 = vector.shape_cast %223 : vector<1x16x128xf32> to vector<16x128xf32>
    %c5_175 = arith.constant 5 : index
    %c2_176 = arith.constant 2 : index
    %c0_177 = arith.constant 0 : index
    %225 = vector.load %arg7[%c5_175, %c2_176, %c0_177] : memref<12x18x128xf32, #tpu.memory_space<vmem>>, vector<1x16x128xf32>
    %226 = vector.shape_cast %225 : vector<1x16x128xf32> to vector<16x128xf32>
    %c7_178 = arith.constant 7 : index
    %c0_179 = arith.constant 0 : index
    %227 = vector.load %arg4[%c7_178, %c0_179] : memref<48x128xf32, #tpu.memory_space<vmem>>, vector<1x128xf32>
    %228 = vector.broadcast %227 : vector<1x128xf32> to vector<16x128xf32>
    %229 = arith.mulf %222, %228 : vector<16x128xf32>
    %230 = arith.addf %212, %229 : vector<16x128xf32>
    %c10_180 = arith.constant 10 : index
    %c0_181 = arith.constant 0 : index
    %231 = vector.load %arg4[%c10_180, %c0_181] : memref<48x128xf32, #tpu.memory_space<vmem>>, vector<1x128xf32>
    %232 = vector.broadcast %231 : vector<1x128xf32> to vector<16x128xf32>
    %233 = arith.mulf %224, %232 : vector<16x128xf32>
    %234 = arith.addf %230, %233 : vector<16x128xf32>
    %c31 = arith.constant 31 : index
    %c0_182 = arith.constant 0 : index
    %235 = vector.load %arg4[%c31, %c0_182] : memref<48x128xf32, #tpu.memory_space<vmem>>, vector<1x128xf32>
    %236 = vector.broadcast %235 : vector<1x128xf32> to vector<16x128xf32>
    %237 = arith.mulf %224, %236 : vector<16x128xf32>
    %238 = arith.addf %220, %237 : vector<16x128xf32>
    %c34 = arith.constant 34 : index
    %c0_183 = arith.constant 0 : index
    %239 = vector.load %arg4[%c34, %c0_183] : memref<48x128xf32, #tpu.memory_space<vmem>>, vector<1x128xf32>
    %240 = vector.broadcast %239 : vector<1x128xf32> to vector<16x128xf32>
    %241 = arith.mulf %226, %240 : vector<16x128xf32>
    %242 = arith.addf %238, %241 : vector<16x128xf32>
    %c9_184 = arith.constant 9 : index
    %c0_185 = arith.constant 0 : index
    %c0_186 = arith.constant 0 : index
    %243 = vector.load %arg7[%c9_184, %c0_185, %c0_186] : memref<12x18x128xf32, #tpu.memory_space<vmem>>, vector<1x16x128xf32>
    %244 = vector.shape_cast %243 : vector<1x16x128xf32> to vector<16x128xf32>
    %c9_187 = arith.constant 9 : index
    %c1_188 = arith.constant 1 : index
    %c0_189 = arith.constant 0 : index
    %245 = vector.load %arg7[%c9_187, %c1_188, %c0_189] : memref<12x18x128xf32, #tpu.memory_space<vmem>>, vector<1x16x128xf32>
    %246 = vector.shape_cast %245 : vector<1x16x128xf32> to vector<16x128xf32>
    %c9_190 = arith.constant 9 : index
    %c2_191 = arith.constant 2 : index
    %c0_192 = arith.constant 0 : index
    %247 = vector.load %arg7[%c9_190, %c2_191, %c0_192] : memref<12x18x128xf32, #tpu.memory_space<vmem>>, vector<1x16x128xf32>
    %248 = vector.shape_cast %247 : vector<1x16x128xf32> to vector<16x128xf32>
    %c8_193 = arith.constant 8 : index
    %c0_194 = arith.constant 0 : index
    %249 = vector.load %arg4[%c8_193, %c0_194] : memref<48x128xf32, #tpu.memory_space<vmem>>, vector<1x128xf32>
    %250 = vector.broadcast %249 : vector<1x128xf32> to vector<16x128xf32>
    %251 = arith.mulf %244, %250 : vector<16x128xf32>
    %252 = arith.addf %234, %251 : vector<16x128xf32>
    %c11_195 = arith.constant 11 : index
    %c0_196 = arith.constant 0 : index
    %253 = vector.load %arg4[%c11_195, %c0_196] : memref<48x128xf32, #tpu.memory_space<vmem>>, vector<1x128xf32>
    %254 = vector.broadcast %253 : vector<1x128xf32> to vector<16x128xf32>
    %255 = arith.mulf %246, %254 : vector<16x128xf32>
    %256 = arith.addf %252, %255 : vector<16x128xf32>
    %c32_197 = arith.constant 32 : index
    %c0_198 = arith.constant 0 : index
    %257 = vector.load %arg4[%c32_197, %c0_198] : memref<48x128xf32, #tpu.memory_space<vmem>>, vector<1x128xf32>
    %258 = vector.broadcast %257 : vector<1x128xf32> to vector<16x128xf32>
    %259 = arith.mulf %246, %258 : vector<16x128xf32>
    %260 = arith.addf %242, %259 : vector<16x128xf32>
    %c35 = arith.constant 35 : index
    %c0_199 = arith.constant 0 : index
    %261 = vector.load %arg4[%c35, %c0_199] : memref<48x128xf32, #tpu.memory_space<vmem>>, vector<1x128xf32>
    %262 = vector.broadcast %261 : vector<1x128xf32> to vector<16x128xf32>
    %263 = arith.mulf %248, %262 : vector<16x128xf32>
    %264 = arith.addf %260, %263 : vector<16x128xf32>
    %c2_200 = arith.constant 2 : index
    %c0_201 = arith.constant 0 : index
    %c0_202 = arith.constant 0 : index
    %265 = vector.load %arg7[%c2_200, %c0_201, %c0_202] : memref<12x18x128xf32, #tpu.memory_space<vmem>>, vector<1x16x128xf32>
    %266 = vector.shape_cast %265 : vector<1x16x128xf32> to vector<16x128xf32>
    %c2_203 = arith.constant 2 : index
    %c1_204 = arith.constant 1 : index
    %c0_205 = arith.constant 0 : index
    %267 = vector.load %arg7[%c2_203, %c1_204, %c0_205] : memref<12x18x128xf32, #tpu.memory_space<vmem>>, vector<1x16x128xf32>
    %268 = vector.shape_cast %267 : vector<1x16x128xf32> to vector<16x128xf32>
    %c2_206 = arith.constant 2 : index
    %c2_207 = arith.constant 2 : index
    %c0_208 = arith.constant 0 : index
    %269 = vector.load %arg7[%c2_206, %c2_207, %c0_208] : memref<12x18x128xf32, #tpu.memory_space<vmem>>, vector<1x16x128xf32>
    %270 = vector.shape_cast %269 : vector<1x16x128xf32> to vector<16x128xf32>
    %c12 = arith.constant 12 : index
    %c0_209 = arith.constant 0 : index
    %271 = vector.load %arg4[%c12, %c0_209] : memref<48x128xf32, #tpu.memory_space<vmem>>, vector<1x128xf32>
    %272 = vector.broadcast %271 : vector<1x128xf32> to vector<16x128xf32>
    %273 = arith.mulf %266, %272 : vector<16x128xf32>
    %274 = arith.addf %256, %273 : vector<16x128xf32>
    %c15 = arith.constant 15 : index
    %c0_210 = arith.constant 0 : index
    %275 = vector.load %arg4[%c15, %c0_210] : memref<48x128xf32, #tpu.memory_space<vmem>>, vector<1x128xf32>
    %276 = vector.broadcast %275 : vector<1x128xf32> to vector<16x128xf32>
    %277 = arith.mulf %268, %276 : vector<16x128xf32>
    %278 = arith.addf %274, %277 : vector<16x128xf32>
    %c36 = arith.constant 36 : index
    %c0_211 = arith.constant 0 : index
    %279 = vector.load %arg4[%c36, %c0_211] : memref<48x128xf32, #tpu.memory_space<vmem>>, vector<1x128xf32>
    %280 = vector.broadcast %279 : vector<1x128xf32> to vector<16x128xf32>
    %281 = arith.mulf %268, %280 : vector<16x128xf32>
    %282 = arith.addf %264, %281 : vector<16x128xf32>
    %c39 = arith.constant 39 : index
    %c0_212 = arith.constant 0 : index
    %283 = vector.load %arg4[%c39, %c0_212] : memref<48x128xf32, #tpu.memory_space<vmem>>, vector<1x128xf32>
    %284 = vector.broadcast %283 : vector<1x128xf32> to vector<16x128xf32>
    %285 = arith.mulf %270, %284 : vector<16x128xf32>
    %286 = arith.addf %282, %285 : vector<16x128xf32>
    %c6_213 = arith.constant 6 : index
    %c0_214 = arith.constant 0 : index
    %c0_215 = arith.constant 0 : index
    %287 = vector.load %arg7[%c6_213, %c0_214, %c0_215] : memref<12x18x128xf32, #tpu.memory_space<vmem>>, vector<1x16x128xf32>
    %288 = vector.shape_cast %287 : vector<1x16x128xf32> to vector<16x128xf32>
    %c6_216 = arith.constant 6 : index
    %c1_217 = arith.constant 1 : index
    %c0_218 = arith.constant 0 : index
    %289 = vector.load %arg7[%c6_216, %c1_217, %c0_218] : memref<12x18x128xf32, #tpu.memory_space<vmem>>, vector<1x16x128xf32>
    %290 = vector.shape_cast %289 : vector<1x16x128xf32> to vector<16x128xf32>
    %c6_219 = arith.constant 6 : index
    %c2_220 = arith.constant 2 : index
    %c0_221 = arith.constant 0 : index
    %291 = vector.load %arg7[%c6_219, %c2_220, %c0_221] : memref<12x18x128xf32, #tpu.memory_space<vmem>>, vector<1x16x128xf32>
    %292 = vector.shape_cast %291 : vector<1x16x128xf32> to vector<16x128xf32>
    %c13 = arith.constant 13 : index
    %c0_222 = arith.constant 0 : index
    %293 = vector.load %arg4[%c13, %c0_222] : memref<48x128xf32, #tpu.memory_space<vmem>>, vector<1x128xf32>
    %294 = vector.broadcast %293 : vector<1x128xf32> to vector<16x128xf32>
    %295 = arith.mulf %288, %294 : vector<16x128xf32>
    %296 = arith.addf %278, %295 : vector<16x128xf32>
    %c16_223 = arith.constant 16 : index
    %c0_224 = arith.constant 0 : index
    %297 = vector.load %arg4[%c16_223, %c0_224] : memref<48x128xf32, #tpu.memory_space<vmem>>, vector<1x128xf32>
    %298 = vector.broadcast %297 : vector<1x128xf32> to vector<16x128xf32>
    %299 = arith.mulf %290, %298 : vector<16x128xf32>
    %300 = arith.addf %296, %299 : vector<16x128xf32>
    %c37 = arith.constant 37 : index
    %c0_225 = arith.constant 0 : index
    %301 = vector.load %arg4[%c37, %c0_225] : memref<48x128xf32, #tpu.memory_space<vmem>>, vector<1x128xf32>
    %302 = vector.broadcast %301 : vector<1x128xf32> to vector<16x128xf32>
    %303 = arith.mulf %290, %302 : vector<16x128xf32>
    %304 = arith.addf %286, %303 : vector<16x128xf32>
    %c40 = arith.constant 40 : index
    %c0_226 = arith.constant 0 : index
    %305 = vector.load %arg4[%c40, %c0_226] : memref<48x128xf32, #tpu.memory_space<vmem>>, vector<1x128xf32>
    %306 = vector.broadcast %305 : vector<1x128xf32> to vector<16x128xf32>
    %307 = arith.mulf %292, %306 : vector<16x128xf32>
    %308 = arith.addf %304, %307 : vector<16x128xf32>
    %c10_227 = arith.constant 10 : index
    %c0_228 = arith.constant 0 : index
    %c0_229 = arith.constant 0 : index
    %309 = vector.load %arg7[%c10_227, %c0_228, %c0_229] : memref<12x18x128xf32, #tpu.memory_space<vmem>>, vector<1x16x128xf32>
    %310 = vector.shape_cast %309 : vector<1x16x128xf32> to vector<16x128xf32>
    %c10_230 = arith.constant 10 : index
    %c1_231 = arith.constant 1 : index
    %c0_232 = arith.constant 0 : index
    %311 = vector.load %arg7[%c10_230, %c1_231, %c0_232] : memref<12x18x128xf32, #tpu.memory_space<vmem>>, vector<1x16x128xf32>
    %312 = vector.shape_cast %311 : vector<1x16x128xf32> to vector<16x128xf32>
    %c10_233 = arith.constant 10 : index
    %c2_234 = arith.constant 2 : index
    %c0_235 = arith.constant 0 : index
    %313 = vector.load %arg7[%c10_233, %c2_234, %c0_235] : memref<12x18x128xf32, #tpu.memory_space<vmem>>, vector<1x16x128xf32>
    %314 = vector.shape_cast %313 : vector<1x16x128xf32> to vector<16x128xf32>
    %c14 = arith.constant 14 : index
    %c0_236 = arith.constant 0 : index
    %315 = vector.load %arg4[%c14, %c0_236] : memref<48x128xf32, #tpu.memory_space<vmem>>, vector<1x128xf32>
    %316 = vector.broadcast %315 : vector<1x128xf32> to vector<16x128xf32>
    %317 = arith.mulf %310, %316 : vector<16x128xf32>
    %318 = arith.addf %300, %317 : vector<16x128xf32>
    %c17_237 = arith.constant 17 : index
    %c0_238 = arith.constant 0 : index
    %319 = vector.load %arg4[%c17_237, %c0_238] : memref<48x128xf32, #tpu.memory_space<vmem>>, vector<1x128xf32>
    %320 = vector.broadcast %319 : vector<1x128xf32> to vector<16x128xf32>
    %321 = arith.mulf %312, %320 : vector<16x128xf32>
    %322 = arith.addf %318, %321 : vector<16x128xf32>
    %c38 = arith.constant 38 : index
    %c0_239 = arith.constant 0 : index
    %323 = vector.load %arg4[%c38, %c0_239] : memref<48x128xf32, #tpu.memory_space<vmem>>, vector<1x128xf32>
    %324 = vector.broadcast %323 : vector<1x128xf32> to vector<16x128xf32>
    %325 = arith.mulf %312, %324 : vector<16x128xf32>
    %326 = arith.addf %308, %325 : vector<16x128xf32>
    %c41 = arith.constant 41 : index
    %c0_240 = arith.constant 0 : index
    %327 = vector.load %arg4[%c41, %c0_240] : memref<48x128xf32, #tpu.memory_space<vmem>>, vector<1x128xf32>
    %328 = vector.broadcast %327 : vector<1x128xf32> to vector<16x128xf32>
    %329 = arith.mulf %314, %328 : vector<16x128xf32>
    %330 = arith.addf %326, %329 : vector<16x128xf32>
    %c3_241 = arith.constant 3 : index
    %c0_242 = arith.constant 0 : index
    %c0_243 = arith.constant 0 : index
    %331 = vector.load %arg7[%c3_241, %c0_242, %c0_243] : memref<12x18x128xf32, #tpu.memory_space<vmem>>, vector<1x16x128xf32>
    %332 = vector.shape_cast %331 : vector<1x16x128xf32> to vector<16x128xf32>
    %c3_244 = arith.constant 3 : index
    %c1_245 = arith.constant 1 : index
    %c0_246 = arith.constant 0 : index
    %333 = vector.load %arg7[%c3_244, %c1_245, %c0_246] : memref<12x18x128xf32, #tpu.memory_space<vmem>>, vector<1x16x128xf32>
    %334 = vector.shape_cast %333 : vector<1x16x128xf32> to vector<16x128xf32>
    %c3_247 = arith.constant 3 : index
    %c2_248 = arith.constant 2 : index
    %c0_249 = arith.constant 0 : index
    %335 = vector.load %arg7[%c3_247, %c2_248, %c0_249] : memref<12x18x128xf32, #tpu.memory_space<vmem>>, vector<1x16x128xf32>
    %336 = vector.shape_cast %335 : vector<1x16x128xf32> to vector<16x128xf32>
    %c18 = arith.constant 18 : index
    %c0_250 = arith.constant 0 : index
    %337 = vector.load %arg4[%c18, %c0_250] : memref<48x128xf32, #tpu.memory_space<vmem>>, vector<1x128xf32>
    %338 = vector.broadcast %337 : vector<1x128xf32> to vector<16x128xf32>
    %339 = arith.mulf %332, %338 : vector<16x128xf32>
    %340 = arith.addf %322, %339 : vector<16x128xf32>
    %c21 = arith.constant 21 : index
    %c0_251 = arith.constant 0 : index
    %341 = vector.load %arg4[%c21, %c0_251] : memref<48x128xf32, #tpu.memory_space<vmem>>, vector<1x128xf32>
    %342 = vector.broadcast %341 : vector<1x128xf32> to vector<16x128xf32>
    %343 = arith.mulf %334, %342 : vector<16x128xf32>
    %344 = arith.addf %340, %343 : vector<16x128xf32>
    %c42 = arith.constant 42 : index
    %c0_252 = arith.constant 0 : index
    %345 = vector.load %arg4[%c42, %c0_252] : memref<48x128xf32, #tpu.memory_space<vmem>>, vector<1x128xf32>
    %346 = vector.broadcast %345 : vector<1x128xf32> to vector<16x128xf32>
    %347 = arith.mulf %334, %346 : vector<16x128xf32>
    %348 = arith.addf %330, %347 : vector<16x128xf32>
    %c45 = arith.constant 45 : index
    %c0_253 = arith.constant 0 : index
    %349 = vector.load %arg4[%c45, %c0_253] : memref<48x128xf32, #tpu.memory_space<vmem>>, vector<1x128xf32>
    %350 = vector.broadcast %349 : vector<1x128xf32> to vector<16x128xf32>
    %351 = arith.mulf %336, %350 : vector<16x128xf32>
    %352 = arith.addf %348, %351 : vector<16x128xf32>
    %c7_254 = arith.constant 7 : index
    %c0_255 = arith.constant 0 : index
    %c0_256 = arith.constant 0 : index
    %353 = vector.load %arg7[%c7_254, %c0_255, %c0_256] : memref<12x18x128xf32, #tpu.memory_space<vmem>>, vector<1x16x128xf32>
    %354 = vector.shape_cast %353 : vector<1x16x128xf32> to vector<16x128xf32>
    %c7_257 = arith.constant 7 : index
    %c1_258 = arith.constant 1 : index
    %c0_259 = arith.constant 0 : index
    %355 = vector.load %arg7[%c7_257, %c1_258, %c0_259] : memref<12x18x128xf32, #tpu.memory_space<vmem>>, vector<1x16x128xf32>
    %356 = vector.shape_cast %355 : vector<1x16x128xf32> to vector<16x128xf32>
    %c7_260 = arith.constant 7 : index
    %c2_261 = arith.constant 2 : index
    %c0_262 = arith.constant 0 : index
    %357 = vector.load %arg7[%c7_260, %c2_261, %c0_262] : memref<12x18x128xf32, #tpu.memory_space<vmem>>, vector<1x16x128xf32>
    %358 = vector.shape_cast %357 : vector<1x16x128xf32> to vector<16x128xf32>
    %c19 = arith.constant 19 : index
    %c0_263 = arith.constant 0 : index
    %359 = vector.load %arg4[%c19, %c0_263] : memref<48x128xf32, #tpu.memory_space<vmem>>, vector<1x128xf32>
    %360 = vector.broadcast %359 : vector<1x128xf32> to vector<16x128xf32>
    %361 = arith.mulf %354, %360 : vector<16x128xf32>
    %362 = arith.addf %344, %361 : vector<16x128xf32>
    %c22 = arith.constant 22 : index
    %c0_264 = arith.constant 0 : index
    %363 = vector.load %arg4[%c22, %c0_264] : memref<48x128xf32, #tpu.memory_space<vmem>>, vector<1x128xf32>
    %364 = vector.broadcast %363 : vector<1x128xf32> to vector<16x128xf32>
    %365 = arith.mulf %356, %364 : vector<16x128xf32>
    %366 = arith.addf %362, %365 : vector<16x128xf32>
    %c43 = arith.constant 43 : index
    %c0_265 = arith.constant 0 : index
    %367 = vector.load %arg4[%c43, %c0_265] : memref<48x128xf32, #tpu.memory_space<vmem>>, vector<1x128xf32>
    %368 = vector.broadcast %367 : vector<1x128xf32> to vector<16x128xf32>
    %369 = arith.mulf %356, %368 : vector<16x128xf32>
    %370 = arith.addf %352, %369 : vector<16x128xf32>
    %c46 = arith.constant 46 : index
    %c0_266 = arith.constant 0 : index
    %371 = vector.load %arg4[%c46, %c0_266] : memref<48x128xf32, #tpu.memory_space<vmem>>, vector<1x128xf32>
    %372 = vector.broadcast %371 : vector<1x128xf32> to vector<16x128xf32>
    %373 = arith.mulf %358, %372 : vector<16x128xf32>
    %374 = arith.addf %370, %373 : vector<16x128xf32>
    %c11_267 = arith.constant 11 : index
    %c0_268 = arith.constant 0 : index
    %c0_269 = arith.constant 0 : index
    %375 = vector.load %arg7[%c11_267, %c0_268, %c0_269] : memref<12x18x128xf32, #tpu.memory_space<vmem>>, vector<1x16x128xf32>
    %376 = vector.shape_cast %375 : vector<1x16x128xf32> to vector<16x128xf32>
    %c11_270 = arith.constant 11 : index
    %c1_271 = arith.constant 1 : index
    %c0_272 = arith.constant 0 : index
    %377 = vector.load %arg7[%c11_270, %c1_271, %c0_272] : memref<12x18x128xf32, #tpu.memory_space<vmem>>, vector<1x16x128xf32>
    %378 = vector.shape_cast %377 : vector<1x16x128xf32> to vector<16x128xf32>
    %c11_273 = arith.constant 11 : index
    %c2_274 = arith.constant 2 : index
    %c0_275 = arith.constant 0 : index
    %379 = vector.load %arg7[%c11_273, %c2_274, %c0_275] : memref<12x18x128xf32, #tpu.memory_space<vmem>>, vector<1x16x128xf32>
    %380 = vector.shape_cast %379 : vector<1x16x128xf32> to vector<16x128xf32>
    %c20 = arith.constant 20 : index
    %c0_276 = arith.constant 0 : index
    %381 = vector.load %arg4[%c20, %c0_276] : memref<48x128xf32, #tpu.memory_space<vmem>>, vector<1x128xf32>
    %382 = vector.broadcast %381 : vector<1x128xf32> to vector<16x128xf32>
    %383 = arith.mulf %376, %382 : vector<16x128xf32>
    %384 = arith.addf %366, %383 : vector<16x128xf32>
    %c23 = arith.constant 23 : index
    %c0_277 = arith.constant 0 : index
    %385 = vector.load %arg4[%c23, %c0_277] : memref<48x128xf32, #tpu.memory_space<vmem>>, vector<1x128xf32>
    %386 = vector.broadcast %385 : vector<1x128xf32> to vector<16x128xf32>
    %387 = arith.mulf %378, %386 : vector<16x128xf32>
    %388 = arith.addf %384, %387 : vector<16x128xf32>
    %c44 = arith.constant 44 : index
    %c0_278 = arith.constant 0 : index
    %389 = vector.load %arg4[%c44, %c0_278] : memref<48x128xf32, #tpu.memory_space<vmem>>, vector<1x128xf32>
    %390 = vector.broadcast %389 : vector<1x128xf32> to vector<16x128xf32>
    %391 = arith.mulf %378, %390 : vector<16x128xf32>
    %392 = arith.addf %374, %391 : vector<16x128xf32>
    %c47 = arith.constant 47 : index
    %c0_279 = arith.constant 0 : index
    %393 = vector.load %arg4[%c47, %c0_279] : memref<48x128xf32, #tpu.memory_space<vmem>>, vector<1x128xf32>
    %394 = vector.broadcast %393 : vector<1x128xf32> to vector<16x128xf32>
    %395 = arith.mulf %380, %394 : vector<16x128xf32>
    %396 = arith.addf %392, %395 : vector<16x128xf32>
    %397 = tpu.concatenate %388, %396 in 0 : vector<16x128xf32>, vector<16x128xf32> -> vector<32x128xf32>
    %cst_280 = arith.constant dense<0.000000e+00> : vector<32x128xf32>
    %398 = tpu.matmul %76, %397, %cst_280 {dimension_numbers = #tpu.dot_dimension_numbers<[1], [0], [0], [1], [0, 0, 1, 1], [], []>} : vector<32x32xf32>, vector<32x128xf32>, vector<32x128xf32> -> vector<32x128xf32>
    %399 = vector.extract_strided_slice %398 {offsets = [0, 0], sizes = [32, 32], strides = [1, 1]} : vector<32x128xf32> to vector<32x32xf32>
    %c0_281 = arith.constant 0 : index
    %c0_282 = arith.constant 0 : index
    %c0_283 = arith.constant 0 : index
    %c0_284 = arith.constant 0 : index
    %400 = vector.load %arg6[%c0_281, %c0_282, %c0_283, %c0_284] : memref<1x4x32x32xf32, #tpu.memory_space<vmem>>, vector<1x1x32x32xf32>
    %401 = vector.shape_cast %400 : vector<1x1x32x32xf32> to vector<32x32xf32>
    %402 = vector.shape_cast %399 : vector<32x32xf32> to vector<1x1x32x32xf32>
    tpu.vector_store %arg6[%c0_281, %c0_282, %c0_283, %c0_284], %402 {strides = array<i32>} : memref<1x4x32x32xf32, #tpu.memory_space<vmem>>, vector<1x1x32x32xf32>,
    %403 = vector.extract_strided_slice %398 {offsets = [0, 32], sizes = [32, 32], strides = [1, 1]} : vector<32x128xf32> to vector<32x32xf32>
    %c0_285 = arith.constant 0 : index
    %c1_286 = arith.constant 1 : index
    %c0_287 = arith.constant 0 : index
    %c0_288 = arith.constant 0 : index
    %404 = vector.load %arg6[%c0_285, %c1_286, %c0_287, %c0_288] : memref<1x4x32x32xf32, #tpu.memory_space<vmem>>, vector<1x1x32x32xf32>
    %405 = vector.shape_cast %404 : vector<1x1x32x32xf32> to vector<32x32xf32>
    %406 = vector.shape_cast %403 : vector<32x32xf32> to vector<1x1x32x32xf32>
    tpu.vector_store %arg6[%c0_285, %c1_286, %c0_287, %c0_288], %406 {strides = array<i32>} : memref<1x4x32x32xf32, #tpu.memory_space<vmem>>, vector<1x1x32x32xf32>,
    %407 = vector.extract_strided_slice %398 {offsets = [0, 64], sizes = [32, 32], strides = [1, 1]} : vector<32x128xf32> to vector<32x32xf32>
    %c0_289 = arith.constant 0 : index
    %c2_290 = arith.constant 2 : index
    %c0_291 = arith.constant 0 : index
    %c0_292 = arith.constant 0 : index
    %408 = vector.load %arg6[%c0_289, %c2_290, %c0_291, %c0_292] : memref<1x4x32x32xf32, #tpu.memory_space<vmem>>, vector<1x1x32x32xf32>
    %409 = vector.shape_cast %408 : vector<1x1x32x32xf32> to vector<32x32xf32>
    %410 = vector.shape_cast %407 : vector<32x32xf32> to vector<1x1x32x32xf32>
    tpu.vector_store %arg6[%c0_289, %c2_290, %c0_291, %c0_292], %410 {strides = array<i32>} : memref<1x4x32x32xf32, #tpu.memory_space<vmem>>, vector<1x1x32x32xf32>,
    %411 = vector.extract_strided_slice %398 {offsets = [0, 96], sizes = [32, 32], strides = [1, 1]} : vector<32x128xf32> to vector<32x32xf32>
    %c0_293 = arith.constant 0 : index
    %c3_294 = arith.constant 3 : index
    %c0_295 = arith.constant 0 : index
    %c0_296 = arith.constant 0 : index
    %412 = vector.load %arg6[%c0_293, %c3_294, %c0_295, %c0_296] : memref<1x4x32x32xf32, #tpu.memory_space<vmem>>, vector<1x1x32x32xf32>
    %413 = vector.shape_cast %412 : vector<1x1x32x32xf32> to vector<32x32xf32>
    %414 = vector.shape_cast %411 : vector<32x32xf32> to vector<1x1x32x32xf32>
    tpu.vector_store %arg6[%c0_293, %c3_294, %c0_295, %c0_296], %414 {strides = array<i32>} : memref<1x4x32x32xf32, #tpu.memory_space<vmem>>, vector<1x1x32x32xf32>,
    return
  }
  func.func @transform_0(%arg0: i32) -> (i32, i32, i32) {
    %c0_i32 = arith.constant 0 : i32
    %c0_i32_0 = arith.constant 0 : i32
    %c0_i32_1 = arith.constant 0 : i32
    return %arg0, %c0_i32, %c0_i32_0 : i32, i32, i32
  }
  func.func @transform_1(%arg0: i32) -> (i32, i32) {
    %c0_i32 = arith.constant 0 : i32
    %c0_i32_0 = arith.constant 0 : i32
    %c0_i32_1 = arith.constant 0 : i32
    return %c0_i32, %c0_i32_0 : i32, i32
  }
  func.func @transform_2(%arg0: i32) -> (i32, i32) {
    %c0_i32 = arith.constant 0 : i32
    %c0_i32_0 = arith.constant 0 : i32
    %c0_i32_1 = arith.constant 0 : i32
    return %c0_i32, %c0_i32_0 : i32, i32
  }
  func.func @transform_3(%arg0: i32) -> (i32, i32) {
    %c0_i32 = arith.constant 0 : i32
    %c0_i32_0 = arith.constant 0 : i32
    %c0_i32_1 = arith.constant 0 : i32
    return %c0_i32, %c0_i32_0 : i32, i32
  }
  func.func @transform_4(%arg0: i32) -> (i32, i32) {
    %c0_i32 = arith.constant 0 : i32
    %c0_i32_0 = arith.constant 0 : i32
    %c0_i32_1 = arith.constant 0 : i32
    return %c0_i32, %c0_i32_0 : i32, i32
  }
  func.func @transform_5(%arg0: i32) -> (i32, i32, i32, i32) {
    %c0_i32 = arith.constant 0 : i32
    %c0_i32_0 = arith.constant 0 : i32
    %c0_i32_1 = arith.constant 0 : i32
    %c0_i32_2 = arith.constant 0 : i32
    return %arg0, %c0_i32, %c0_i32_0, %c0_i32_1 : i32, i32, i32, i32
  }
}

</mosaic_0001>

<llo_original>
// kernel: tpu_custom_call.1
$region0: #{tpu_custom_call.1}
  #allocation0 [shape = 'u32[]', space=smem, size = 0x4, offset = 0x4, fixed_abs, tag = 'smem constant byte address 0x4 - core index']
  #allocation1 [shape = 'u32[144,128]{1,0:T(1,128)}', space=vmem, size = 0x12000, scoped, tag = 'internal scratch']
  #allocation2 [shape = 'f32[12,18,128]{2,1,0:T(8,128)}', space=vmem, size = 0x24000, scoped, tag = 'scratch operand']
  %s0 = inlined_call_operand.vmem [shape: f32[2,64,16], index: 0, kind: input, shape index: {}]
  %s1 = inlined_call_operand.vmem [shape: f32[48,128], index: 1, kind: input, shape index: {}]
  %s2 = inlined_call_operand.vmem [shape: f32[32,32], index: 2, kind: input, shape index: {}]
  %s3 = inlined_call_operand.vmem [shape: f32[48,128], index: 3, kind: input, shape index: {}]
  %s4 = inlined_call_operand.vmem [shape: f32[1,128], index: 4, kind: input, shape index: {}]
  %s5 = inlined_call_operand.hbm [shape: f32[2,4,32,32], index: 5, kind: output, shape index: {}]
  %s6 = sld [smem:[#allocation0]]
  $region53: #{tpu_custom_call.1} parent=0
    _
  %s8 = ssub.s32 1, %s6
  %s9 = scalar_select 0, %s8, %s6
  $region1: #{tpu_custom_call.1} parent=0
    #allocation3 [shape = 'u8[131072]{0}', space=vmem, size = 0x20000, scoped, tag = 'output window, operand 0']
    #allocation4 [shape = 's32[2]{0}', space=sflag, size = 0x8, scoped, tag = 'scoped memory for tpu_custom_call.1']
    %10 = vsyncpa [#allocation4], 0
    %s11 = scalar_lea.sflag [#allocation4], 1
    %12 = vsyncpa %s11, 0
    loop: start=0, step=1, limit=4
    $region2: #{tpu_custom_call.1} parent=1 // loop_pre_header
      _
    $region3: #{tpu_custom_call.1} parent=1 // loop_header
      %s14 = sphi 0, %s18
      %p15 = scmp.ge.s32.totalorder %s14, 4
      %s24 = sphi 0, %s26
      %s27 = sphi 0, %s24
      %s28 = sphi 0, %s27
      %s44 = sphi 0, %s28
      %s48 = sphi 0, %s48
      %s50 = sphi 0, %s48
      %s51 = sphi 0, %s50
      %s65 = sphi 0, %s51
      %s69 = sphi 0, %s69
      %s71 = sphi 0, %s69
      %s72 = sphi 0, %s71
      %s86 = sphi 0, %s72
      %s90 = sphi 0, %s90
      %s92 = sphi 0, %s90
      %s93 = sphi 0, %s92
      %s107 = sphi 0, %s93
      %s111 = sphi 0, %s111
      %s113 = sphi 0, %s111
      %s114 = sphi 0, %s113
      %s128 = sphi 0, %s114
      %s134 = sphi 0, %s136
      %s137 = sphi 0, %s134
      %s138 = sphi 0, %s137
      %s154 = sphi 0, %s138
    $region4: #{tpu_custom_call.1} parent=1 // loop_header_branch
      %17 = sbr.rel (%p15) target = $region8
    $region5: #{tpu_custom_call.1} parent=1 // loop_body
      %s19 = ssub.s32 %s14, 1
      %s20 = ssub.s32 %s14, 2
      %s21 = sadd.s32 %s14, 1
      %s22 = ssub.s32 %s14, %s21
      %p23 = scmp.eq.s32.totalorder %s22, 0
      %s25 = sadd.s32 %s24, 1
      %s26 = scalar_select %p23, %s24, %s25
      %p29 = pneg %p23
      %p30 = scmp.eq.s32.totalorder %s14, 1
      %p31 = por %p29, %p30
      %p32 = scmp.ne.s32.totalorder %s24, %s27
      %p33 = scmp.eq.s32.totalorder %s14, 0
      %p34 = por %p32, %p33
      %p35 = scmp.ne.s32.totalorder %s24, %s27
      %p36 = scmp.eq.s32.totalorder %s19, 1
      %p37 = por %p35, %p36
      %p38 = scmp.ne.s32.totalorder %s27, %s28
      %p39 = scmp.eq.s32.totalorder %s19, 0
      %p40 = por %p38, %p39
      %p41 = scmp.ne.s32.totalorder %s27, %s28
      %p42 = scmp.eq.s32.totalorder %s20, 1
      %p43 = por %p41, %p42
      %p45 = scmp.ne.s32.totalorder %s28, %s44
      %p46 = scmp.eq.s32.totalorder %s20, 0
      %p47 = por %p45, %p46
      %s49 = sadd.s32 %s48, 1
      %p52 = scmp.eq.s32.totalorder %s14, 1
      %p53 = scmp.ne.s32.totalorder %s48, %s50
      %p54 = scmp.eq.s32.totalorder %s14, 0
      %p55 = por %p53, %p54
      %p56 = scmp.ne.s32.totalorder %s48, %s50
      %p57 = scmp.eq.s32.totalorder %s19, 1
      %p58 = por %p56, %p57
      %p59 = scmp.ne.s32.totalorder %s50, %s51
      %p60 = scmp.eq.s32.totalorder %s19, 0
      %p61 = por %p59, %p60
      %p62 = scmp.ne.s32.totalorder %s50, %s51
      %p63 = scmp.eq.s32.totalorder %s20, 1
      %p64 = por %p62, %p63
      %p66 = scmp.ne.s32.totalorder %s51, %s65
      %p67 = scmp.eq.s32.totalorder %s20, 0
      %p68 = por %p66, %p67
      %s70 = sadd.s32 %s69, 1
      %p73 = scmp.eq.s32.totalorder %s14, 1
      %p74 = scmp.ne.s32.totalorder %s69, %s71
      %p75 = scmp.eq.s32.totalorder %s14, 0
      %p76 = por %p74, %p75
      %p77 = scmp.ne.s32.totalorder %s69, %s71
      %p78 = scmp.eq.s32.totalorder %s19, 1
      %p79 = por %p77, %p78
      %p80 = scmp.ne.s32.totalorder %s71, %s72
      %p81 = scmp.eq.s32.totalorder %s19, 0
      %p82 = por %p80, %p81
      %p83 = scmp.ne.s32.totalorder %s71, %s72
      %p84 = scmp.eq.s32.totalorder %s20, 1
      %p85 = por %p83, %p84
      %p87 = scmp.ne.s32.totalorder %s72, %s86
      %p88 = scmp.eq.s32.totalorder %s20, 0
      %p89 = por %p87, %p88
      %s91 = sadd.s32 %s90, 1
      %p94 = scmp.eq.s32.totalorder %s14, 1
      %p95 = scmp.ne.s32.totalorder %s90, %s92
      %p96 = scmp.eq.s32.totalorder %s14, 0
      %p97 = por %p95, %p96
      %p98 = scmp.ne.s32.totalorder %s90, %s92
      %p99 = scmp.eq.s32.totalorder %s19, 1
      %p100 = por %p98, %p99
      %p101 = scmp.ne.s32.totalorder %s92, %s93
      %p102 = scmp.eq.s32.totalorder %s19, 0
      %p103 = por %p101, %p102
      %p104 = scmp.ne.s32.totalorder %s92, %s93
      %p105 = scmp.eq.s32.totalorder %s20, 1
      %p106 = por %p104, %p105
      %p108 = scmp.ne.s32.totalorder %s93, %s107
      %p109 = scmp.eq.s32.totalorder %s20, 0
      %p110 = por %p108, %p109
      %s112 = sadd.s32 %s111, 1
      %p115 = scmp.eq.s32.totalorder %s14, 1
      %p116 = scmp.ne.s32.totalorder %s111, %s113
      %p117 = scmp.eq.s32.totalorder %s14, 0
      %p118 = por %p116, %p117
      %p119 = scmp.ne.s32.totalorder %s111, %s113
      %p120 = scmp.eq.s32.totalorder %s19, 1
      %p121 = por %p119, %p120
      %p122 = scmp.ne.s32.totalorder %s113, %s114
      %p123 = scmp.eq.s32.totalorder %s19, 0
      %p124 = por %p122, %p123
      %p125 = scmp.ne.s32.totalorder %s113, %s114
      %p126 = scmp.eq.s32.totalorder %s20, 1
      %p127 = por %p125, %p126
      %p129 = scmp.ne.s32.totalorder %s114, %s128
      %p130 = scmp.eq.s32.totalorder %s20, 0
      %p131 = por %p129, %p130
      %s132 = ssub.s32 %s14, %s21
      %p133 = scmp.eq.s32.totalorder %s132, 0
      %s135 = sadd.s32 %s134, 1
      %s136 = scalar_select %p133, %s134, %s135
      %p139 = pneg %p133
      %p140 = scmp.eq.s32.totalorder %s14, 1
      %p141 = por %p139, %p140
      %p142 = scmp.ne.s32.totalorder %s134, %s137
      %p143 = scmp.eq.s32.totalorder %s14, 0
      %p144 = por %p142, %p143
      %p145 = scmp.ne.s32.totalorder %s134, %s137
      %p146 = scmp.eq.s32.totalorder %s19, 1
      %p147 = por %p145, %p146
      %p148 = scmp.ne.s32.totalorder %s137, %s138
      %p149 = scmp.eq.s32.totalorder %s19, 0
      %p150 = por %p148, %p149
      %p151 = scmp.ne.s32.totalorder %s137, %s138
      %p152 = scmp.eq.s32.totalorder %s20, 1
      %p153 = por %p151, %p152
      %p155 = scmp.ne.s32.totalorder %s138, %s154
      %p156 = scmp.eq.s32.totalorder %s20, 0
      %p157 = por %p155, %p156
      %p158 = scmp.le.s32.totalorder 1, %s14
      %p159 = scmp.lt.s32.totalorder %s14, 3
      %p160 = pnand %p158, %p159
      %p161 = pneg %p160
      // Predicated region
      $region9: #{tpu_custom_call.1} parent=5 // pred_check
        _
      $region10: #{tpu_custom_call.1} parent=5 // pred_check_branch
        %163 = sbr.rel (%p160) target = $region12
      $region11: #{tpu_custom_call.1} parent=5 // pred_region
        %s164 = ssub.s32 %s14, 1
        // Predicated region
        $region13: #{tpu_custom_call.1} parent=11 // pred_check
          %p165 = pneg %p61
        $region14: #{tpu_custom_call.1} parent=11 // pred_check_branch
          %167 = sbr.rel (%p165) target = $region16
        $region15: #{tpu_custom_call.1} parent=11 // pred_region
          _
        $region16: #{tpu_custom_call.1} parent=11 // pred_fallthru
          _
        // Predicated region
        $region17: #{tpu_custom_call.1} parent=11 // pred_check
          %p168 = pneg %p82
        $region18: #{tpu_custom_call.1} parent=11 // pred_check_branch
          %170 = sbr.rel (%p168) target = $region20
        $region19: #{tpu_custom_call.1} parent=11 // pred_region
          _
        $region20: #{tpu_custom_call.1} parent=11 // pred_fallthru
          _
        // Predicated region
        $region21: #{tpu_custom_call.1} parent=11 // pred_check
          %p171 = pneg %p103
        $region22: #{tpu_custom_call.1} parent=11 // pred_check_branch
          %173 = sbr.rel (%p171) target = $region24
        $region23: #{tpu_custom_call.1} parent=11 // pred_region
          _
        $region24: #{tpu_custom_call.1} parent=11 // pred_fallthru
          _
        // Predicated region
        $region25: #{tpu_custom_call.1} parent=11 // pred_check
          %p174 = pneg %p124
        $region26: #{tpu_custom_call.1} parent=11 // pred_check_branch
          %176 = sbr.rel (%p174) target = $region28
        $region27: #{tpu_custom_call.1} parent=11 // pred_region
          _
        $region28: #{tpu_custom_call.1} parent=11 // pred_fallthru
          _
      $region12: #{tpu_custom_call.1} parent=5 // pred_fallthru
        _
      %p177 = scmp.lt.s32.totalorder %s14, 2
      // Predicated region
      $region29: #{tpu_custom_call.1} parent=5 // pred_check
        %p178 = pneg %p177
      $region30: #{tpu_custom_call.1} parent=5 // pred_check_branch
        %180 = sbr.rel (%p178) target = $region32
      $region31: #{tpu_custom_call.1} parent=5 // pred_region
        // Predicated region
        $region33: #{tpu_custom_call.1} parent=31 // pred_check
          %p181 = pneg %p34
        $region34: #{tpu_custom_call.1} parent=31 // pred_check_branch
          %183 = sbr.rel (%p181) target = $region36
        $region35: #{tpu_custom_call.1} parent=31 // pred_region
          %p184 = scmp.lt.s32.totalorder %s14, 1
          %s185 = scalar_select %p184, %s14, 1
          %s186 = smul.addr %s185, 8
          %s187 = smul.addr %s186, 8
          %s188 = scalar_lea.vmem %s0, %s187
        $region36: #{tpu_custom_call.1} parent=31 // pred_fallthru
          _
      $region32: #{tpu_custom_call.1} parent=5 // pred_fallthru
        _
      %p189 = scmp.le.s32.totalorder 1, %s14
      %p190 = scmp.lt.s32.totalorder %s14, 3
      %p191 = pnand %p189, %p190
      %p192 = pneg %p191
      // Predicated region
      $region37: #{tpu_custom_call.1} parent=5 // pred_check
        _
      $region38: #{tpu_custom_call.1} parent=5 // pred_check_branch
        %194 = sbr.rel (%p191) target = $region40
      $region39: #{tpu_custom_call.1} parent=5 // pred_region
        %s195 = ssub.s32 %s14, 1
        %p196 = scmp.lt.s32.totalorder %s19, 1
        %s197 = scalar_select %p196, %s19, 1
        %s198 = smul.addr %s197, 8
        %s199 = smul.addr %s198, 8
        %s200 = scalar_lea.vmem %s0, %s199
        %p201 = pneg %p40
        %p202 = pneg %p37
        %p203 = pneg %p61
        %p204 = pneg %p58
        %p205 = pneg %p82
        %p206 = pneg %p79
        %p207 = pneg %p103
        %p208 = pneg %p100
        %p209 = pneg %p124
        %p210 = pneg %p121
        %p211 = pneg %p150
        %p212 = pneg %p147
        %s213 = sand.u32 %s137, 1
        %s214 = scalar_lea.sflag [#allocation4], %s213
        %s215 = sand.u32 %s137, 1
        %s216 = smul.addr %s215, 128
        %s217 = scalar_lea.vmem [#allocation3], %s216
        %p218 = scmp.lt.s32.totalorder %s19, 1
        %s219 = scalar_select %p218, %s19, 1
        %s220 = smul.addr %s219, 8
        %s221 = smul.addr %s220, 8
        %s222 = scalar_lea.vmem %s0, %s221
        %223 = vst [vmem:[#allocation2] sm:$0x1] 0.0
        %224 = vst [vmem:[#allocation2 + $0x11] sm:$0x1] 0.0
        %s225 = scalar_lea.vmem [#allocation2], 24
        %226 = vst [vmem:[%s225] sm:$0x1] 0.0
        %227 = vst [vmem:[%s225 + $0x11] sm:$0x1] 0.0
        %s228 = scalar_lea.vmem [#allocation2], 48
        %229 = vst [vmem:[%s228] sm:$0x1] 0.0
        %230 = vst [vmem:[%s228 + $0x11] sm:$0x1] 0.0
        %s231 = scalar_lea.vmem [#allocation2], 72
        %232 = vst [vmem:[%s231] sm:$0x1] 0.0
        %233 = vst [vmem:[%s231 + $0x11] sm:$0x1] 0.0
        %s234 = scalar_lea.vmem [#allocation2], 96
        %235 = vst [vmem:[%s234] sm:$0x1] 0.0
        %236 = vst [vmem:[%s234 + $0x11] sm:$0x1] 0.0
        %s237 = scalar_lea.vmem [#allocation2], 120
        %238 = vst [vmem:[%s237] sm:$0x1] 0.0
        %239 = vst [vmem:[%s237 + $0x11] sm:$0x1] 0.0
        %s240 = scalar_lea.vmem [#allocation2], 144
        %241 = vst [vmem:[%s240] sm:$0x1] 0.0
        %242 = vst [vmem:[%s240 + $0x11] sm:$0x1] 0.0
        %s243 = scalar_lea.vmem [#allocation2], 168
        %244 = vst [vmem:[%s243] sm:$0x1] 0.0
        %245 = vst [vmem:[%s243 + $0x11] sm:$0x1] 0.0
        %s246 = scalar_lea.vmem [#allocation2], 192
        %247 = vst [vmem:[%s246] sm:$0x1] 0.0
        %248 = vst [vmem:[%s246 + $0x11] sm:$0x1] 0.0
        %s249 = scalar_lea.vmem [#allocation2], 216
        %250 = vst [vmem:[%s249] sm:$0x1] 0.0
        %251 = vst [vmem:[%s249 + $0x11] sm:$0x1] 0.0
        %s252 = scalar_lea.vmem [#allocation2], 240
        %253 = vst [vmem:[%s252] sm:$0x1] 0.0
        %254 = vst [vmem:[%s252 + $0x11] sm:$0x1] 0.0
        %s255 = scalar_lea.vmem [#allocation2], 264
        %256 = vst [vmem:[%s255] sm:$0x1] 0.0
        %257 = vst [vmem:[%s255 + $0x11] sm:$0x1] 0.0
        %v258 = vld [vmem:[%s4] sm:$0x1]
        %v260 = vlaneseq
        %v261 = vshrl.u32 %v260, 7
        %v262 = vsub.s32 0, %v261
        %v263 = vrot.slane %v258, %v262
        %v265 = vld [vmem:[%s2] sm:$0xff]
        %v266 = vld [vmem:[%s2 + $0x8] sm:$0xff]
        %v267 = vld [vmem:[%s2 + $0x10] sm:$0xff]
        %v268 = vld [vmem:[%s2 + $0x18] sm:$0xff]
        %v269 = vld [vmem:[%s222] sm:$0xff]
        %v270 = vld [vmem:[%s222 + $0x8] sm:$0xff]
        %v271 = vld [vmem:[%s222 + $0x10] sm:$0xff]
        %v272 = vld [vmem:[%s222 + $0x18] sm:$0xff]
        %v273 = vld [vmem:[%s222 + $0x20] sm:$0xff]
        %v274 = vld [vmem:[%s222 + $0x28] sm:$0xff]
        %v275 = vld [vmem:[%s222 + $0x30] sm:$0xff]
        %v276 = vld [vmem:[%s222 + $0x38] sm:$0xff]
        %v277 = vld [vmem:[%s1] sm:$0xff]
        %v278 = vld [vmem:[%s1 + $0x8] sm:$0xff]
        %vm279 = vcmask 130048
        %v281 = vsel %vm279, %v269, 0
        %v284 = vsel %vm279, %v270, 0
        %v287 = vsel %vm279, %v271, 0
        %v290 = vsel %vm279, %v272, 0
        %v293 = vsel %vm279, %v273, 0
        %v296 = vsel %vm279, %v274, 0
        %v299 = vsel %vm279, %v275, 0
        %v302 = vsel %vm279, %v276, 0
        %304 = vmatprep.subr.mxu0 0.0
        %305 = vmatpush1.msra.mxu0 %v277
        %306 = vmatprep.subr.mxu0 0.0
        %307 = vmatpush1.msra.mxu0 %v278
        %308 = vmatprep.subr.mxu0 0.0
        %309 = vmatpush1.msra.mxu0 0.0
        %310 = vmatprep.subr.mxu0 0.0
        %311 = vmatpush1.msra.mxu0 0.0
        %312 = vmatprep.subr.mxu0 0.0
        %313 = vmatpush1.msra.mxu0 0.0
        %314 = vmatprep.subr.mxu0 0.0
        %315 = vmatpush1.msra.mxu0 0.0
        %316 = vmatprep.subr.mxu0 0.0
        %317 = vmatpush1.msra.mxu0 0.0
        %318 = vmatprep.subr.mxu0 0.0
        %319 = vmatpush1.msra.mxu0 0.0
        %320 = vmatprep.subr.mxu0 0.0
        %321 = vmatpush1.msra.mxu0 0.0
        %322 = vmatprep.subr.mxu0 0.0
        %323 = vmatpush1.msra.mxu0 0.0
        %324 = vmatprep.subr.mxu0 0.0
        %325 = vmatpush1.msra.mxu0 0.0
        %326 = vmatprep.subr.mxu0 0.0
        %327 = vmatpush1.msra.mxu0 0.0
        %328 = vmatprep.subr.mxu0 0.0
        %329 = vmatpush1.msra.mxu0 0.0
        %330 = vmatprep.subr.mxu0 0.0
        %331 = vmatpush1.msra.mxu0 0.0
        %332 = vmatprep.subr.mxu0 0.0
        %333 = vmatpush1.msra.mxu0 0.0
        %334 = vmatprep.subr.mxu0 0.0
        %335 = vmatpush1.msra.mxu0 0.0
        %336 = vmatprep.subr.mxu0 0.0
        %337 = vmatpush1.msra.mxu0 0.0
        %338 = vmatprep.subr.mxu0 0.0
        %339 = vmatpush1.msra.mxu0 0.0
        %340 = vmatprep.subr.mxu0 0.0
        %341 = vmatpush1.msra.mxu0 0.0
        %342 = vmatprep.subr.mxu0 0.0
        %343 = vmatpush1.msra.mxu0 0.0
        %344 = vmatprep.subr.mxu0 0.0
        %345 = vmatpush1.msra.mxu0 0.0
        %346 = vmatprep.subr.mxu0 0.0
        %347 = vmatpush1.msra.mxu0 0.0
        %348 = vmatprep.subr.mxu0 0.0
        %349 = vmatpush1.msra.mxu0 0.0
        %350 = vmatprep.subr.mxu0 0.0
        %351 = vmatpush1.msra.mxu0 0.0
        %352 = vmatprep.subr.mxu0 0.0
        %353 = vmatpush1.msra.mxu0 0.0
        %354 = vmatprep.subr.mxu0 0.0
        %355 = vmatpush1.msra.mxu0 0.0
        %356 = vmatprep.subr.mxu0 0.0
        %357 = vmatpush1.msra.mxu0 0.0
        %358 = vmatprep.subr.mxu0 0.0
        %359 = vmatpush1.msra.mxu0 0.0
        %360 = vmatprep.subr.mxu0 0.0
        %361 = vmatpush1.msra.mxu0 0.0
        %362 = vmatprep.subr.mxu0 0.0
        %363 = vmatpush1.msra.mxu0 0.0
        %364 = vmatprep.subr.mxu0 0.0
        %365 = vmatpush1.msra.mxu0 0.0
        %366 = vmatprep.subr.mxu0 0.0
        %367 = vmatpush1.msra.mxu0 0.0
        %368 = vmatprep.mubr.f32.mxu0 0.0
        %369 = vmatmul.mubr.f32.gmra.mrb[0].mxu0 %v281
        %v370 = vpop.f32.mrb[0].mxu0
        %v371 = vadd.f32 0.0, %v370
        %v372 = vpop.f32.mrb[0].mxu0
        %373 = vmatprep.mubr.f32.mxu0 0.0
        %374 = vmatmul.mubr.f32.gmra.mrb[0].mxu0 %v284
        %v375 = vpop.f32.mrb[0].mxu0
        %v376 = vadd.f32 0.0, %v375
        %v377 = vpop.f32.mrb[0].mxu0
        %378 = vmatprep.mubr.f32.mxu0 0.0
        %379 = vmatmul.mubr.f32.gmra.mrb[0].mxu0 %v287
        %v380 = vpop.f32.mrb[0].mxu0
        %v381 = vadd.f32 0.0, %v380
        %v382 = vpop.f32.mrb[0].mxu0
        %383 = vmatprep.mubr.f32.mxu0 0.0
        %384 = vmatmul.mubr.f32.gmra.mrb[0].mxu0 %v290
        %v385 = vpop.f32.mrb[0].mxu0
        %v386 = vadd.f32 0.0, %v385
        %v387 = vpop.f32.mrb[0].mxu0
        %388 = vmatprep.mubr.f32.mxu0 0.0
        %389 = vmatmul.mubr.f32.gmra.mrb[0].mxu0 %v293
        %v390 = vpop.f32.mrb[0].mxu0
        %v391 = vadd.f32 0.0, %v390
        %v392 = vpop.f32.mrb[0].mxu0
        %393 = vmatprep.mubr.f32.mxu0 0.0
        %394 = vmatmul.mubr.f32.gmra.mrb[0].mxu0 %v296
        %v395 = vpop.f32.mrb[0].mxu0
        %v396 = vadd.f32 0.0, %v395
        %v397 = vpop.f32.mrb[0].mxu0
        %398 = vmatprep.mubr.f32.mxu0 0.0
        %399 = vmatmul.mubr.f32.gmra.mrb[0].mxu0 %v299
        %v400 = vpop.f32.mrb[0].mxu0
        %v401 = vadd.f32 0.0, %v400
        %v402 = vpop.f32.mrb[0].mxu0
        %403 = vmatprep.mubr.f32.mxu0 0.0
        %404 = vmatmul.mubr.f32.gmra.mrb[0].mxu0 %v302
        %v405 = vpop.f32.mrb[0].mxu0
        %v406 = vadd.f32 0.0, %v405
        %v407 = vpop.f32.mrb[0].mxu0
        %408 = vdwg.mxu0
        %409 = vst [vmem:[#allocation2 + $0x1] sm:$0xff] %v371
        %410 = vst [vmem:[#allocation2 + $0x9] sm:$0xff] %v376
        %411 = vst [vmem:[%s225 + $0x1] sm:$0xff] %v381
        %412 = vst [vmem:[%s225 + $0x9] sm:$0xff] %v386
        %413 = vst [vmem:[%s228 + $0x1] sm:$0xff] %v391
        %414 = vst [vmem:[%s228 + $0x9] sm:$0xff] %v396
        %415 = vst [vmem:[%s231 + $0x1] sm:$0xff] %v401
        %416 = vst [vmem:[%s231 + $0x9] sm:$0xff] %v406
        %v417 = vld [vmem:[%s1 + $0x10] sm:$0xff]
        %v418 = vld [vmem:[%s1 + $0x18] sm:$0xff]
        %419 = vmatprep.subr.mxu0 0.0
        %420 = vmatpush1.msra.mxu0 %v417
        %421 = vmatprep.subr.mxu0 0.0
        %422 = vmatpush1.msra.mxu0 %v418
        %423 = vmatprep.subr.mxu0 0.0
        %424 = vmatpush1.msra.mxu0 0.0
        %425 = vmatprep.subr.mxu0 0.0
        %426 = vmatpush1.msra.mxu0 0.0
        %427 = vmatprep.subr.mxu0 0.0
        %428 = vmatpush1.msra.mxu0 0.0
        %429 = vmatprep.subr.mxu0 0.0
        %430 = vmatpush1.msra.mxu0 0.0
        %431 = vmatprep.subr.mxu0 0.0
        %432 = vmatpush1.msra.mxu0 0.0
        %433 = vmatprep.subr.mxu0 0.0
        %434 = vmatpush1.msra.mxu0 0.0
        %435 = vmatprep.subr.mxu0 0.0
        %436 = vmatpush1.msra.mxu0 0.0
        %437 = vmatprep.subr.mxu0 0.0
        %438 = vmatpush1.msra.mxu0 0.0
        %439 = vmatprep.subr.mxu0 0.0
        %440 = vmatpush1.msra.mxu0 0.0
        %441 = vmatprep.subr.mxu0 0.0
        %442 = vmatpush1.msra.mxu0 0.0
        %443 = vmatprep.subr.mxu0 0.0
        %444 = vmatpush1.msra.mxu0 0.0
        %445 = vmatprep.subr.mxu0 0.0
        %446 = vmatpush1.msra.mxu0 0.0
        %447 = vmatprep.subr.mxu0 0.0
        %448 = vmatpush1.msra.mxu0 0.0
        %449 = vmatprep.subr.mxu0 0.0
        %450 = vmatpush1.msra.mxu0 0.0
        %451 = vmatprep.subr.mxu0 0.0
        %452 = vmatpush1.msra.mxu0 0.0
        %453 = vmatprep.subr.mxu0 0.0
        %454 = vmatpush1.msra.mxu0 0.0
        %455 = vmatprep.subr.mxu0 0.0
        %456 = vmatpush1.msra.mxu0 0.0
        %457 = vmatprep.subr.mxu0 0.0
        %458 = vmatpush1.msra.mxu0 0.0
        %459 = vmatprep.subr.mxu0 0.0
        %460 = vmatpush1.msra.mxu0 0.0
        %461 = vmatprep.subr.mxu0 0.0
        %462 = vmatpush1.msra.mxu0 0.0
        %463 = vmatprep.subr.mxu0 0.0
        %464 = vmatpush1.msra.mxu0 0.0
        %465 = vmatprep.subr.mxu0 0.0
        %466 = vmatpush1.msra.mxu0 0.0
        %467 = vmatprep.subr.mxu0 0.0
        %468 = vmatpush1.msra.mxu0 0.0
        %469 = vmatprep.subr.mxu0 0.0
        %470 = vmatpush1.msra.mxu0 0.0
        %471 = vmatprep.subr.mxu0 0.0
        %472 = vmatpush1.msra.mxu0 0.0
        %473 = vmatprep.subr.mxu0 0.0
        %474 = vmatpush1.msra.mxu0 0.0
        %475 = vmatprep.subr.mxu0 0.0
        %476 = vmatpush1.msra.mxu0 0.0
        %477 = vmatprep.subr.mxu0 0.0
        %478 = vmatpush1.msra.mxu0 0.0
        %479 = vmatprep.subr.mxu0 0.0
        %480 = vmatpush1.msra.mxu0 0.0
        %481 = vmatprep.subr.mxu0 0.0
        %482 = vmatpush1.msra.mxu0 0.0
        %483 = vmatprep.mubr.f32.mxu0 0.0
        %484 = vmatmul.mubr.f32.gmra.mrb[0].mxu0 %v281
        %v485 = vpop.f32.mrb[0].mxu0
        %v486 = vadd.f32 0.0, %v485
        %v487 = vpop.f32.mrb[0].mxu0
        %488 = vmatprep.mubr.f32.mxu0 0.0
        %489 = vmatmul.mubr.f32.gmra.mrb[0].mxu0 %v284
        %v490 = vpop.f32.mrb[0].mxu0
        %v491 = vadd.f32 0.0, %v490
        %v492 = vpop.f32.mrb[0].mxu0
        %493 = vmatprep.mubr.f32.mxu0 0.0
        %494 = vmatmul.mubr.f32.gmra.mrb[0].mxu0 %v287
        %v495 = vpop.f32.mrb[0].mxu0
        %v496 = vadd.f32 0.0, %v495
        %v497 = vpop.f32.mrb[0].mxu0
        %498 = vmatprep.mubr.f32.mxu0 0.0
        %499 = vmatmul.mubr.f32.gmra.mrb[0].mxu0 %v290
        %v500 = vpop.f32.mrb[0].mxu0
        %v501 = vadd.f32 0.0, %v500
        %v502 = vpop.f32.mrb[0].mxu0
        %503 = vmatprep.mubr.f32.mxu0 0.0
        %504 = vmatmul.mubr.f32.gmra.mrb[0].mxu0 %v293
        %v505 = vpop.f32.mrb[0].mxu0
        %v506 = vadd.f32 0.0, %v505
        %v507 = vpop.f32.mrb[0].mxu0
        %508 = vmatprep.mubr.f32.mxu0 0.0
        %509 = vmatmul.mubr.f32.gmra.mrb[0].mxu0 %v296
        %v510 = vpop.f32.mrb[0].mxu0
        %v511 = vadd.f32 0.0, %v510
        %v512 = vpop.f32.mrb[0].mxu0
        %513 = vmatprep.mubr.f32.mxu0 0.0
        %514 = vmatmul.mubr.f32.gmra.mrb[0].mxu0 %v299
        %v515 = vpop.f32.mrb[0].mxu0
        %v516 = vadd.f32 0.0, %v515
        %v517 = vpop.f32.mrb[0].mxu0
        %518 = vmatprep.mubr.f32.mxu0 0.0
        %519 = vmatmul.mubr.f32.gmra.mrb[0].mxu0 %v302
        %v520 = vpop.f32.mrb[0].mxu0
        %v521 = vadd.f32 0.0, %v520
        %v522 = vpop.f32.mrb[0].mxu0
        %523 = vdwg.mxu0
        %524 = vst [vmem:[%s234 + $0x1] sm:$0xff] %v486
        %525 = vst [vmem:[%s234 + $0x9] sm:$0xff] %v491
        %526 = vst [vmem:[%s237 + $0x1] sm:$0xff] %v496
        %527 = vst [vmem:[%s237 + $0x9] sm:$0xff] %v501
        %528 = vst [vmem:[%s240 + $0x1] sm:$0xff] %v506
        %529 = vst [vmem:[%s240 + $0x9] sm:$0xff] %v511
        %530 = vst [vmem:[%s243 + $0x1] sm:$0xff] %v516
        %531 = vst [vmem:[%s243 + $0x9] sm:$0xff] %v521
        %v532 = vld [vmem:[%s1 + $0x20] sm:$0xff]
        %v533 = vld [vmem:[%s1 + $0x28] sm:$0xff]
        %534 = vmatprep.subr.mxu0 0.0
        %535 = vmatpush1.msra.mxu0 %v532
        %536 = vmatprep.subr.mxu0 0.0
        %537 = vmatpush1.msra.mxu0 %v533
        %538 = vmatprep.subr.mxu0 0.0
        %539 = vmatpush1.msra.mxu0 0.0
        %540 = vmatprep.subr.mxu0 0.0
        %541 = vmatpush1.msra.mxu0 0.0
        %542 = vmatprep.subr.mxu0 0.0
        %543 = vmatpush1.msra.mxu0 0.0
        %544 = vmatprep.subr.mxu0 0.0
        %545 = vmatpush1.msra.mxu0 0.0
        %546 = vmatprep.subr.mxu0 0.0
        %547 = vmatpush1.msra.mxu0 0.0
        %548 = vmatprep.subr.mxu0 0.0
        %549 = vmatpush1.msra.mxu0 0.0
        %550 = vmatprep.subr.mxu0 0.0
        %551 = vmatpush1.msra.mxu0 0.0
        %552 = vmatprep.subr.mxu0 0.0
        %553 = vmatpush1.msra.mxu0 0.0
        %554 = vmatprep.subr.mxu0 0.0
        %555 = vmatpush1.msra.mxu0 0.0
        %556 = vmatprep.subr.mxu0 0.0
        %557 = vmatpush1.msra.mxu0 0.0
        %558 = vmatprep.subr.mxu0 0.0
        %559 = vmatpush1.msra.mxu0 0.0
        %560 = vmatprep.subr.mxu0 0.0
        %561 = vmatpush1.msra.mxu0 0.0
        %562 = vmatprep.subr.mxu0 0.0
        %563 = vmatpush1.msra.mxu0 0.0
        %564 = vmatprep.subr.mxu0 0.0
        %565 = vmatpush1.msra.mxu0 0.0
        %566 = vmatprep.subr.mxu0 0.0
        %567 = vmatpush1.msra.mxu0 0.0
        %568 = vmatprep.subr.mxu0 0.0
        %569 = vmatpush1.msra.mxu0 0.0
        %570 = vmatprep.subr.mxu0 0.0
        %571 = vmatpush1.msra.mxu0 0.0
        %572 = vmatprep.subr.mxu0 0.0
        %573 = vmatpush1.msra.mxu0 0.0
        %574 = vmatprep.subr.mxu0 0.0
        %575 = vmatpush1.msra.mxu0 0.0
        %576 = vmatprep.subr.mxu0 0.0
        %577 = vmatpush1.msra.mxu0 0.0
        %578 = vmatprep.subr.mxu0 0.0
        %579 = vmatpush1.msra.mxu0 0.0
        %580 = vmatprep.subr.mxu0 0.0
        %581 = vmatpush1.msra.mxu0 0.0
        %582 = vmatprep.subr.mxu0 0.0
        %583 = vmatpush1.msra.mxu0 0.0
        %584 = vmatprep.subr.mxu0 0.0
        %585 = vmatpush1.msra.mxu0 0.0
        %586 = vmatprep.subr.mxu0 0.0
        %587 = vmatpush1.msra.mxu0 0.0
        %588 = vmatprep.subr.mxu0 0.0
        %589 = vmatpush1.msra.mxu0 0.0
        %590 = vmatprep.subr.mxu0 0.0
        %591 = vmatpush1.msra.mxu0 0.0
        %592 = vmatprep.subr.mxu0 0.0
        %593 = vmatpush1.msra.mxu0 0.0
        %594 = vmatprep.subr.mxu0 0.0
        %595 = vmatpush1.msra.mxu0 0.0
        %596 = vmatprep.subr.mxu0 0.0
        %597 = vmatpush1.msra.mxu0 0.0
        %598 = vmatprep.mubr.f32.mxu0 0.0
        %599 = vmatmul.mubr.f32.gmra.mrb[0].mxu0 %v281
        %v600 = vpop.f32.mrb[0].mxu0
        %v601 = vadd.f32 0.0, %v600
        %v602 = vpop.f32.mrb[0].mxu0
        %603 = vmatprep.mubr.f32.mxu0 0.0
        %604 = vmatmul.mubr.f32.gmra.mrb[0].mxu0 %v284
        %v605 = vpop.f32.mrb[0].mxu0
        %v606 = vadd.f32 0.0, %v605
        %v607 = vpop.f32.mrb[0].mxu0
        %608 = vmatprep.mubr.f32.mxu0 0.0
        %609 = vmatmul.mubr.f32.gmra.mrb[0].mxu0 %v287
        %v610 = vpop.f32.mrb[0].mxu0
        %v611 = vadd.f32 0.0, %v610
        %v612 = vpop.f32.mrb[0].mxu0
        %613 = vmatprep.mubr.f32.mxu0 0.0
        %614 = vmatmul.mubr.f32.gmra.mrb[0].mxu0 %v290
        %v615 = vpop.f32.mrb[0].mxu0
        %v616 = vadd.f32 0.0, %v615
        %v617 = vpop.f32.mrb[0].mxu0
        %618 = vmatprep.mubr.f32.mxu0 0.0
        %619 = vmatmul.mubr.f32.gmra.mrb[0].mxu0 %v293
        %v620 = vpop.f32.mrb[0].mxu0
        %v621 = vadd.f32 0.0, %v620
        %v622 = vpop.f32.mrb[0].mxu0
        %623 = vmatprep.mubr.f32.mxu0 0.0
        %624 = vmatmul.mubr.f32.gmra.mrb[0].mxu0 %v296
        %v625 = vpop.f32.mrb[0].mxu0
        %v626 = vadd.f32 0.0, %v625
        %v627 = vpop.f32.mrb[0].mxu0
        %628 = vmatprep.mubr.f32.mxu0 0.0
        %629 = vmatmul.mubr.f32.gmra.mrb[0].mxu0 %v299
        %v630 = vpop.f32.mrb[0].mxu0
        %v631 = vadd.f32 0.0, %v630
        %v632 = vpop.f32.mrb[0].mxu0
        %633 = vmatprep.mubr.f32.mxu0 0.0
        %634 = vmatmul.mubr.f32.gmra.mrb[0].mxu0 %v302
        %v635 = vpop.f32.mrb[0].mxu0
        %v636 = vadd.f32 0.0, %v635
        %v637 = vpop.f32.mrb[0].mxu0
        %638 = vdwg.mxu0
        %639 = vst [vmem:[%s246 + $0x1] sm:$0xff] %v601
        %640 = vst [vmem:[%s246 + $0x9] sm:$0xff] %v606
        %641 = vst [vmem:[%s249 + $0x1] sm:$0xff] %v611
        %642 = vst [vmem:[%s249 + $0x9] sm:$0xff] %v616
        %643 = vst [vmem:[%s252 + $0x1] sm:$0xff] %v621
        %644 = vst [vmem:[%s252 + $0x9] sm:$0xff] %v626
        %645 = vst [vmem:[%s255 + $0x1] sm:$0xff] %v631
        %646 = vst [vmem:[%s255 + $0x9] sm:$0xff] %v636
        %v647 = vld [vmem:[#allocation2] sm:$0xff]
        %v648 = vld [vmem:[#allocation2 + $0x8] sm:$0xff]
        %v649 = vld [vmem:[#allocation2 + $0x1] sm:$0xff]
        %v650 = vld [vmem:[#allocation2 + $0x9] sm:$0xff]
        %v651 = vld [vmem:[#allocation2 + $0x2] sm:$0xff]
        %v652 = vld [vmem:[#allocation2 + $0xa] sm:$0xff]
        %v653 = vld [vmem:[%s3] sm:$0x1]
        %v654 = vlaneseq
        %v655 = vshrl.u32 %v654, 7
        %v656 = vsub.s32 0, %v655
        %v657 = vrot.slane %v653, %v656
        %v658 = vmul.f32 %v647, %v657
        %v659 = vmul.f32 %v648, %v657
        %v660 = vadd.f32 %v263, %v658
        %v661 = vadd.f32 %v263, %v659
        %v662 = vld [vmem:[%s3 + $0x3] sm:$0x1]
        %v663 = vlaneseq
        %v664 = vshrl.u32 %v663, 7
        %v665 = vsub.s32 0, %v664
        %v666 = vrot.slane %v662, %v665
        %v667 = vmul.f32 %v649, %v666
        %v668 = vmul.f32 %v650, %v666
        %v669 = vadd.f32 %v660, %v667
        %v670 = vadd.f32 %v661, %v668
        %v671 = vld [vmem:[%s3 + $0x18] sm:$0x1]
        %v672 = vlaneseq
        %v673 = vshrl.u32 %v672, 7
        %v674 = vsub.s32 0, %v673
        %v675 = vrot.slane %v671, %v674
        %v676 = vmul.f32 %v649, %v675
        %v677 = vmul.f32 %v650, %v675
        %v678 = vadd.f32 %v263, %v676
        %v679 = vadd.f32 %v263, %v677
        %v680 = vld [vmem:[%s3 + $0x1b] sm:$0x1]
        %v681 = vlaneseq
        %v682 = vshrl.u32 %v681, 7
        %v683 = vsub.s32 0, %v682
        %v684 = vrot.slane %v680, %v683
        %v685 = vmul.f32 %v651, %v684
        %v686 = vmul.f32 %v652, %v684
        %v687 = vadd.f32 %v678, %v685
        %v688 = vadd.f32 %v679, %v686
        %v689 = vld [vmem:[%s234] sm:$0xff]
        %v690 = vld [vmem:[%s234 + $0x8] sm:$0xff]
        %v691 = vld [vmem:[%s234 + $0x1] sm:$0xff]
        %v692 = vld [vmem:[%s234 + $0x9] sm:$0xff]
        %v693 = vld [vmem:[%s234 + $0x2] sm:$0xff]
        %v694 = vld [vmem:[%s234 + $0xa] sm:$0xff]
        %v695 = vld [vmem:[%s3 + $0x1] sm:$0x1]
        %v696 = vlaneseq
        %v697 = vshrl.u32 %v696, 7
        %v698 = vsub.s32 0, %v697
        %v699 = vrot.slane %v695, %v698
        %v700 = vmul.f32 %v689, %v699
        %v701 = vmul.f32 %v690, %v699
        %v702 = vadd.f32 %v669, %v700
        %v703 = vadd.f32 %v670, %v701
        %v704 = vld [vmem:[%s3 + $0x4] sm:$0x1]
        %v705 = vlaneseq
        %v706 = vshrl.u32 %v705, 7
        %v707 = vsub.s32 0, %v706
        %v708 = vrot.slane %v704, %v707
        %v709 = vmul.f32 %v691, %v708
        %v710 = vmul.f32 %v692, %v708
        %v711 = vadd.f32 %v702, %v709
        %v712 = vadd.f32 %v703, %v710
        %v713 = vld [vmem:[%s3 + $0x19] sm:$0x1]
        %v714 = vlaneseq
        %v715 = vshrl.u32 %v714, 7
        %v716 = vsub.s32 0, %v715
        %v717 = vrot.slane %v713, %v716
        %v718 = vmul.f32 %v691, %v717
        %v719 = vmul.f32 %v692, %v717
        %v720 = vadd.f32 %v687, %v718
        %v721 = vadd.f32 %v688, %v719
        %v722 = vld [vmem:[%s3 + $0x1c] sm:$0x1]
        %v723 = vlaneseq
        %v724 = vshrl.u32 %v723, 7
        %v725 = vsub.s32 0, %v724
        %v726 = vrot.slane %v722, %v725
        %v727 = vmul.f32 %v693, %v726
        %v728 = vmul.f32 %v694, %v726
        %v729 = vadd.f32 %v720, %v727
        %v730 = vadd.f32 %v721, %v728
        %v731 = vld [vmem:[%s246] sm:$0xff]
        %v732 = vld [vmem:[%s246 + $0x8] sm:$0xff]
        %v733 = vld [vmem:[%s246 + $0x1] sm:$0xff]
        %v734 = vld [vmem:[%s246 + $0x9] sm:$0xff]
        %v735 = vld [vmem:[%s246 + $0x2] sm:$0xff]
        %v736 = vld [vmem:[%s246 + $0xa] sm:$0xff]
        %v737 = vld [vmem:[%s3 + $0x2] sm:$0x1]
        %v738 = vlaneseq
        %v739 = vshrl.u32 %v738, 7
        %v740 = vsub.s32 0, %v739
        %v741 = vrot.slane %v737, %v740
        %v742 = vmul.f32 %v731, %v741
        %v743 = vmul.f32 %v732, %v741
        %v744 = vadd.f32 %v711, %v742
        %v745 = vadd.f32 %v712, %v743
        %v746 = vld [vmem:[%s3 + $0x5] sm:$0x1]
        %v747 = vlaneseq
        %v748 = vshrl.u32 %v747, 7
        %v749 = vsub.s32 0, %v748
        %v750 = vrot.slane %v746, %v749
        %v751 = vmul.f32 %v733, %v750
        %v752 = vmul.f32 %v734, %v750
        %v753 = vadd.f32 %v744, %v751
        %v754 = vadd.f32 %v745, %v752
        %v755 = vld [vmem:[%s3 + $0x1a] sm:$0x1]
        %v756 = vlaneseq
        %v757 = vshrl.u32 %v756, 7
        %v758 = vsub.s32 0, %v757
        %v759 = vrot.slane %v755, %v758
        %v760 = vmul.f32 %v733, %v759
        %v761 = vmul.f32 %v734, %v759
        %v762 = vadd.f32 %v729, %v760
        %v763 = vadd.f32 %v730, %v761
        %v764 = vld [vmem:[%s3 + $0x1d] sm:$0x1]
        %v765 = vlaneseq
        %v766 = vshrl.u32 %v765, 7
        %v767 = vsub.s32 0, %v766
        %v768 = vrot.slane %v764, %v767
        %v769 = vmul.f32 %v735, %v768
        %v770 = vmul.f32 %v736, %v768
        %v771 = vadd.f32 %v762, %v769
        %v772 = vadd.f32 %v763, %v770
        %v773 = vld [vmem:[%s225] sm:$0xff]
        %v774 = vld [vmem:[%s225 + $0x8] sm:$0xff]
        %v775 = vld [vmem:[%s225 + $0x1] sm:$0xff]
        %v776 = vld [vmem:[%s225 + $0x9] sm:$0xff]
        %v777 = vld [vmem:[%s225 + $0x2] sm:$0xff]
        %v778 = vld [vmem:[%s225 + $0xa] sm:$0xff]
        %v779 = vld [vmem:[%s3 + $0x6] sm:$0x1]
        %v780 = vlaneseq
        %v781 = vshrl.u32 %v780, 7
        %v782 = vsub.s32 0, %v781
        %v783 = vrot.slane %v779, %v782
        %v784 = vmul.f32 %v773, %v783
        %v785 = vmul.f32 %v774, %v783
        %v786 = vadd.f32 %v753, %v784
        %v787 = vadd.f32 %v754, %v785
        %v788 = vld [vmem:[%s3 + $0x9] sm:$0x1]
        %v789 = vlaneseq
        %v790 = vshrl.u32 %v789, 7
        %v791 = vsub.s32 0, %v790
        %v792 = vrot.slane %v788, %v791
        %v793 = vmul.f32 %v775, %v792
        %v794 = vmul.f32 %v776, %v792
        %v795 = vadd.f32 %v786, %v793
        %v796 = vadd.f32 %v787, %v794
        %v797 = vld [vmem:[%s3 + $0x1e] sm:$0x1]
        %v798 = vlaneseq
        %v799 = vshrl.u32 %v798, 7
        %v800 = vsub.s32 0, %v799
        %v801 = vrot.slane %v797, %v800
        %v802 = vmul.f32 %v775, %v801
        %v803 = vmul.f32 %v776, %v801
        %v804 = vadd.f32 %v771, %v802
        %v805 = vadd.f32 %v772, %v803
        %v806 = vld [vmem:[%s3 + $0x21] sm:$0x1]
        %v807 = vlaneseq
        %v808 = vshrl.u32 %v807, 7
        %v809 = vsub.s32 0, %v808
        %v810 = vrot.slane %v806, %v809
        %v811 = vmul.f32 %v777, %v810
        %v812 = vmul.f32 %v778, %v810
        %v813 = vadd.f32 %v804, %v811
        %v814 = vadd.f32 %v805, %v812
        %v815 = vld [vmem:[%s237] sm:$0xff]
        %v816 = vld [vmem:[%s237 + $0x8] sm:$0xff]
        %v817 = vld [vmem:[%s237 + $0x1] sm:$0xff]
        %v818 = vld [vmem:[%s237 + $0x9] sm:$0xff]
        %v819 = vld [vmem:[%s237 + $0x2] sm:$0xff]
        %v820 = vld [vmem:[%s237 + $0xa] sm:$0xff]
        %v821 = vld [vmem:[%s3 + $0x7] sm:$0x1]
        %v822 = vlaneseq
        %v823 = vshrl.u32 %v822, 7
        %v824 = vsub.s32 0, %v823
        %v825 = vrot.slane %v821, %v824
        %v826 = vmul.f32 %v815, %v825
        %v827 = vmul.f32 %v816, %v825
        %v828 = vadd.f32 %v795, %v826
        %v829 = vadd.f32 %v796, %v827
        %v830 = vld [vmem:[%s3 + $0xa] sm:$0x1]
        %v831 = vlaneseq
        %v832 = vshrl.u32 %v831, 7
        %v833 = vsub.s32 0, %v832
        %v834 = vrot.slane %v830, %v833
        %v835 = vmul.f32 %v817, %v834
        %v836 = vmul.f32 %v818, %v834
        %v837 = vadd.f32 %v828, %v835
        %v838 = vadd.f32 %v829, %v836
        %v839 = vld [vmem:[%s3 + $0x1f] sm:$0x1]
        %v840 = vlaneseq
        %v841 = vshrl.u32 %v840, 7
        %v842 = vsub.s32 0, %v841
        %v843 = vrot.slane %v839, %v842
        %v844 = vmul.f32 %v817, %v843
        %v845 = vmul.f32 %v818, %v843
        %v846 = vadd.f32 %v813, %v844
        %v847 = vadd.f32 %v814, %v845
        %v848 = vld [vmem:[%s3 + $0x22] sm:$0x1]
        %v849 = vlaneseq
        %v850 = vshrl.u32 %v849, 7
        %v851 = vsub.s32 0, %v850
        %v852 = vrot.slane %v848, %v851
        %v853 = vmul.f32 %v819, %v852
        %v854 = vmul.f32 %v820, %v852
        %v855 = vadd.f32 %v846, %v853
        %v856 = vadd.f32 %v847, %v854
        %v857 = vld [vmem:[%s249] sm:$0xff]
        %v858 = vld [vmem:[%s249 + $0x8] sm:$0xff]
        %v859 = vld [vmem:[%s249 + $0x1] sm:$0xff]
        %v860 = vld [vmem:[%s249 + $0x9] sm:$0xff]
        %v861 = vld [vmem:[%s249 + $0x2] sm:$0xff]
        %v862 = vld [vmem:[%s249 + $0xa] sm:$0xff]
        %v863 = vld [vmem:[%s3 + $0x8] sm:$0x1]
        %v864 = vlaneseq
        %v865 = vshrl.u32 %v864, 7
        %v866 = vsub.s32 0, %v865
        %v867 = vrot.slane %v863, %v866
        %v868 = vmul.f32 %v857, %v867
        %v869 = vmul.f32 %v858, %v867
        %v870 = vadd.f32 %v837, %v868
        %v871 = vadd.f32 %v838, %v869
        %v872 = vld [vmem:[%s3 + $0xb] sm:$0x1]
        %v873 = vlaneseq
        %v874 = vshrl.u32 %v873, 7
        %v875 = vsub.s32 0, %v874
        %v876 = vrot.slane %v872, %v875
        %v877 = vmul.f32 %v859, %v876
        %v878 = vmul.f32 %v860, %v876
        %v879 = vadd.f32 %v870, %v877
        %v880 = vadd.f32 %v871, %v878
        %v881 = vld [vmem:[%s3 + $0x20] sm:$0x1]
        %v882 = vlaneseq
        %v883 = vshrl.u32 %v882, 7
        %v884 = vsub.s32 0, %v883
        %v885 = vrot.slane %v881, %v884
        %v886 = vmul.f32 %v859, %v885
        %v887 = vmul.f32 %v860, %v885
        %v888 = vadd.f32 %v855, %v886
        %v889 = vadd.f32 %v856, %v887
        %v890 = vld [vmem:[%s3 + $0x23] sm:$0x1]
        %v891 = vlaneseq
        %v892 = vshrl.u32 %v891, 7
        %v893 = vsub.s32 0, %v892
        %v894 = vrot.slane %v890, %v893
        %v895 = vmul.f32 %v861, %v894
        %v896 = vmul.f32 %v862, %v894
        %v897 = vadd.f32 %v888, %v895
        %v898 = vadd.f32 %v889, %v896
        %v899 = vld [vmem:[%s228] sm:$0xff]
        %v900 = vld [vmem:[%s228 + $0x8] sm:$0xff]
        %v901 = vld [vmem:[%s228 + $0x1] sm:$0xff]
        %v902 = vld [vmem:[%s228 + $0x9] sm:$0xff]
        %v903 = vld [vmem:[%s228 + $0x2] sm:$0xff]
        %v904 = vld [vmem:[%s228 + $0xa] sm:$0xff]
        %v905 = vld [vmem:[%s3 + $0xc] sm:$0x1]
        %v906 = vlaneseq
        %v907 = vshrl.u32 %v906, 7
        %v908 = vsub.s32 0, %v907
        %v909 = vrot.slane %v905, %v908
        %v910 = vmul.f32 %v899, %v909
        %v911 = vmul.f32 %v900, %v909
        %v912 = vadd.f32 %v879, %v910
        %v913 = vadd.f32 %v880, %v911
        %v914 = vld [vmem:[%s3 + $0xf] sm:$0x1]
        %v915 = vlaneseq
        %v916 = vshrl.u32 %v915, 7
        %v917 = vsub.s32 0, %v916
        %v918 = vrot.slane %v914, %v917
        %v919 = vmul.f32 %v901, %v918
        %v920 = vmul.f32 %v902, %v918
        %v921 = vadd.f32 %v912, %v919
        %v922 = vadd.f32 %v913, %v920
        %v923 = vld [vmem:[%s3 + $0x24] sm:$0x1]
        %v924 = vlaneseq
        %v925 = vshrl.u32 %v924, 7
        %v926 = vsub.s32 0, %v925
        %v927 = vrot.slane %v923, %v926
        %v928 = vmul.f32 %v901, %v927
        %v929 = vmul.f32 %v902, %v927
        %v930 = vadd.f32 %v897, %v928
        %v931 = vadd.f32 %v898, %v929
        %v932 = vld [vmem:[%s3 + $0x27] sm:$0x1]
        %v933 = vlaneseq
        %v934 = vshrl.u32 %v933, 7
        %v935 = vsub.s32 0, %v934
        %v936 = vrot.slane %v932, %v935
        %v937 = vmul.f32 %v903, %v936
        %v938 = vmul.f32 %v904, %v936
        %v939 = vadd.f32 %v930, %v937
        %v940 = vadd.f32 %v931, %v938
        %v941 = vld [vmem:[%s240] sm:$0xff]
        %v942 = vld [vmem:[%s240 + $0x8] sm:$0xff]
        %v943 = vld [vmem:[%s240 + $0x1] sm:$0xff]
        %v944 = vld [vmem:[%s240 + $0x9] sm:$0xff]
        %v945 = vld [vmem:[%s240 + $0x2] sm:$0xff]
        %v946 = vld [vmem:[%s240 + $0xa] sm:$0xff]
        %v947 = vld [vmem:[%s3 + $0xd] sm:$0x1]
        %v948 = vlaneseq
        %v949 = vshrl.u32 %v948, 7
        %v950 = vsub.s32 0, %v949
        %v951 = vrot.slane %v947, %v950
        %v952 = vmul.f32 %v941, %v951
        %v953 = vmul.f32 %v942, %v951
        %v954 = vadd.f32 %v921, %v952
        %v955 = vadd.f32 %v922, %v953
        %v956 = vld [vmem:[%s3 + $0x10] sm:$0x1]
        %v957 = vlaneseq
        %v958 = vshrl.u32 %v957, 7
        %v959 = vsub.s32 0, %v958
        %v960 = vrot.slane %v956, %v959
        %v961 = vmul.f32 %v943, %v960
        %v962 = vmul.f32 %v944, %v960
        %v963 = vadd.f32 %v954, %v961
        %v964 = vadd.f32 %v955, %v962
        %v965 = vld [vmem:[%s3 + $0x25] sm:$0x1]
        %v966 = vlaneseq
        %v967 = vshrl.u32 %v966, 7
        %v968 = vsub.s32 0, %v967
        %v969 = vrot.slane %v965, %v968
        %v970 = vmul.f32 %v943, %v969
        %v971 = vmul.f32 %v944, %v969
        %v972 = vadd.f32 %v939, %v970
        %v973 = vadd.f32 %v940, %v971
        %v974 = vld [vmem:[%s3 + $0x28] sm:$0x1]
        %v975 = vlaneseq
        %v976 = vshrl.u32 %v975, 7
        %v977 = vsub.s32 0, %v976
        %v978 = vrot.slane %v974, %v977
        %v979 = vmul.f32 %v945, %v978
        %v980 = vmul.f32 %v946, %v978
        %v981 = vadd.f32 %v972, %v979
        %v982 = vadd.f32 %v973, %v980
        %v983 = vld [vmem:[%s252] sm:$0xff]
        %v984 = vld [vmem:[%s252 + $0x8] sm:$0xff]
        %v985 = vld [vmem:[%s252 + $0x1] sm:$0xff]
        %v986 = vld [vmem:[%s252 + $0x9] sm:$0xff]
        %v987 = vld [vmem:[%s252 + $0x2] sm:$0xff]
        %v988 = vld [vmem:[%s252 + $0xa] sm:$0xff]
        %v989 = vld [vmem:[%s3 + $0xe] sm:$0x1]
        %v990 = vlaneseq
        %v991 = vshrl.u32 %v990, 7
        %v992 = vsub.s32 0, %v991
        %v993 = vrot.slane %v989, %v992
        %v994 = vmul.f32 %v983, %v993
        %v995 = vmul.f32 %v984, %v993
        %v996 = vadd.f32 %v963, %v994
        %v997 = vadd.f32 %v964, %v995
        %v998 = vld [vmem:[%s3 + $0x11] sm:$0x1]
        %v999 = vlaneseq
        %v1000 = vshrl.u32 %v999, 7
        %v1001 = vsub.s32 0, %v1000
        %v1002 = vrot.slane %v998, %v1001
        %v1003 = vmul.f32 %v985, %v1002
        %v1004 = vmul.f32 %v986, %v1002
        %v1005 = vadd.f32 %v996, %v1003
        %v1006 = vadd.f32 %v997, %v1004
        %v1007 = vld [vmem:[%s3 + $0x26] sm:$0x1]
        %v1008 = vlaneseq
        %v1009 = vshrl.u32 %v1008, 7
        %v1010 = vsub.s32 0, %v1009
        %v1011 = vrot.slane %v1007, %v1010
        %v1012 = vmul.f32 %v985, %v1011
        %v1013 = vmul.f32 %v986, %v1011
        %v1014 = vadd.f32 %v981, %v1012
        %v1015 = vadd.f32 %v982, %v1013
        %v1016 = vld [vmem:[%s3 + $0x29] sm:$0x1]
        %v1017 = vlaneseq
        %v1018 = vshrl.u32 %v1017, 7
        %v1019 = vsub.s32 0, %v1018
        %v1020 = vrot.slane %v1016, %v1019
        %v1021 = vmul.f32 %v987, %v1020
        %v1022 = vmul.f32 %v988, %v1020
        %v1023 = vadd.f32 %v1014, %v1021
        %v1024 = vadd.f32 %v1015, %v1022
        %v1025 = vld [vmem:[%s231] sm:$0xff]
        %v1026 = vld [vmem:[%s231 + $0x8] sm:$0xff]
        %v1027 = vld [vmem:[%s231 + $0x1] sm:$0xff]
        %v1028 = vld [vmem:[%s231 + $0x9] sm:$0xff]
        %v1029 = vld [vmem:[%s231 + $0x2] sm:$0xff]
        %v1030 = vld [vmem:[%s231 + $0xa] sm:$0xff]
        %v1031 = vld [vmem:[%s3 + $0x12] sm:$0x1]
        %v1032 = vlaneseq
        %v1033 = vshrl.u32 %v1032, 7
        %v1034 = vsub.s32 0, %v1033
        %v1035 = vrot.slane %v1031, %v1034
        %v1036 = vmul.f32 %v1025, %v1035
        %v1037 = vmul.f32 %v1026, %v1035
        %v1038 = vadd.f32 %v1005, %v1036
        %v1039 = vadd.f32 %v1006, %v1037
        %v1040 = vld [vmem:[%s3 + $0x15] sm:$0x1]
        %v1041 = vlaneseq
        %v1042 = vshrl.u32 %v1041, 7
        %v1043 = vsub.s32 0, %v1042
        %v1044 = vrot.slane %v1040, %v1043
        %v1045 = vmul.f32 %v1027, %v1044
        %v1046 = vmul.f32 %v1028, %v1044
        %v1047 = vadd.f32 %v1038, %v1045
        %v1048 = vadd.f32 %v1039, %v1046
        %v1049 = vld [vmem:[%s3 + $0x2a] sm:$0x1]
        %v1050 = vlaneseq
        %v1051 = vshrl.u32 %v1050, 7
        %v1052 = vsub.s32 0, %v1051
        %v1053 = vrot.slane %v1049, %v1052
        %v1054 = vmul.f32 %v1027, %v1053
        %v1055 = vmul.f32 %v1028, %v1053
        %v1056 = vadd.f32 %v1023, %v1054
        %v1057 = vadd.f32 %v1024, %v1055
        %v1058 = vld [vmem:[%s3 + $0x2d] sm:$0x1]
        %v1059 = vlaneseq
        %v1060 = vshrl.u32 %v1059, 7
        %v1061 = vsub.s32 0, %v1060
        %v1062 = vrot.slane %v1058, %v1061
        %v1063 = vmul.f32 %v1029, %v1062
        %v1064 = vmul.f32 %v1030, %v1062
        %v1065 = vadd.f32 %v1056, %v1063
        %v1066 = vadd.f32 %v1057, %v1064
        %v1067 = vld [vmem:[%s243] sm:$0xff]
        %v1068 = vld [vmem:[%s243 + $0x8] sm:$0xff]
        %v1069 = vld [vmem:[%s243 + $0x1] sm:$0xff]
        %v1070 = vld [vmem:[%s243 + $0x9] sm:$0xff]
        %v1071 = vld [vmem:[%s243 + $0x2] sm:$0xff]
        %v1072 = vld [vmem:[%s243 + $0xa] sm:$0xff]
        %v1073 = vld [vmem:[%s3 + $0x13] sm:$0x1]
        %v1074 = vlaneseq
        %v1075 = vshrl.u32 %v1074, 7
        %v1076 = vsub.s32 0, %v1075
        %v1077 = vrot.slane %v1073, %v1076
        %v1078 = vmul.f32 %v1067, %v1077
        %v1079 = vmul.f32 %v1068, %v1077
        %v1080 = vadd.f32 %v1047, %v1078
        %v1081 = vadd.f32 %v1048, %v1079
        %v1082 = vld [vmem:[%s3 + $0x16] sm:$0x1]
        %v1083 = vlaneseq
        %v1084 = vshrl.u32 %v1083, 7
        %v1085 = vsub.s32 0, %v1084
        %v1086 = vrot.slane %v1082, %v1085
        %v1087 = vmul.f32 %v1069, %v1086
        %v1088 = vmul.f32 %v1070, %v1086
        %v1089 = vadd.f32 %v1080, %v1087
        %v1090 = vadd.f32 %v1081, %v1088
        %v1091 = vld [vmem:[%s3 + $0x2b] sm:$0x1]
        %v1092 = vlaneseq
        %v1093 = vshrl.u32 %v1092, 7
        %v1094 = vsub.s32 0, %v1093
        %v1095 = vrot.slane %v1091, %v1094
        %v1096 = vmul.f32 %v1069, %v1095
        %v1097 = vmul.f32 %v1070, %v1095
        %v1098 = vadd.f32 %v1065, %v1096
        %v1099 = vadd.f32 %v1066, %v1097
        %v1100 = vld [vmem:[%s3 + $0x2e] sm:$0x1]
        %v1101 = vlaneseq
        %v1102 = vshrl.u32 %v1101, 7
        %v1103 = vsub.s32 0, %v1102
        %v1104 = vrot.slane %v1100, %v1103
        %v1105 = vmul.f32 %v1071, %v1104
        %v1106 = vmul.f32 %v1072, %v1104
        %v1107 = vadd.f32 %v1098, %v1105
        %v1108 = vadd.f32 %v1099, %v1106
        %v1109 = vld [vmem:[%s255] sm:$0xff]
        %v1110 = vld [vmem:[%s255 + $0x8] sm:$0xff]
        %v1111 = vld [vmem:[%s255 + $0x1] sm:$0xff]
        %v1112 = vld [vmem:[%s255 + $0x9] sm:$0xff]
        %v1113 = vld [vmem:[%s255 + $0x2] sm:$0xff]
        %v1114 = vld [vmem:[%s255 + $0xa] sm:$0xff]
        %v1115 = vld [vmem:[%s3 + $0x14] sm:$0x1]
        %v1116 = vlaneseq
        %v1117 = vshrl.u32 %v1116, 7
        %v1118 = vsub.s32 0, %v1117
        %v1119 = vrot.slane %v1115, %v1118
        %v1120 = vmul.f32 %v1109, %v1119
        %v1121 = vmul.f32 %v1110, %v1119
        %v1122 = vadd.f32 %v1089, %v1120
        %v1123 = vadd.f32 %v1090, %v1121
        %v1124 = vld [vmem:[%s3 + $0x17] sm:$0x1]
        %v1125 = vlaneseq
        %v1126 = vshrl.u32 %v1125, 7
        %v1127 = vsub.s32 0, %v1126
        %v1128 = vrot.slane %v1124, %v1127
        %v1129 = vmul.f32 %v1111, %v1128
        %v1130 = vmul.f32 %v1112, %v1128
        %v1131 = vadd.f32 %v1122, %v1129
        %v1132 = vadd.f32 %v1123, %v1130
        %v1133 = vld [vmem:[%s3 + $0x2c] sm:$0x1]
        %v1134 = vlaneseq
        %v1135 = vshrl.u32 %v1134, 7
        %v1136 = vsub.s32 0, %v1135
        %v1137 = vrot.slane %v1133, %v1136
        %v1138 = vmul.f32 %v1111, %v1137
        %v1139 = vmul.f32 %v1112, %v1137
        %v1140 = vadd.f32 %v1107, %v1138
        %v1141 = vadd.f32 %v1108, %v1139
        %v1142 = vld [vmem:[%s3 + $0x2f] sm:$0x1]
        %v1143 = vlaneseq
        %v1144 = vshrl.u32 %v1143, 7
        %v1145 = vsub.s32 0, %v1144
        %v1146 = vrot.slane %v1142, %v1145
        %v1147 = vmul.f32 %v1113, %v1146
        %v1148 = vmul.f32 %v1114, %v1146
        %v1149 = vadd.f32 %v1140, %v1147
        %v1150 = vadd.f32 %v1141, %v1148
        %vm1151 = vcmask 261120
        %v1153 = vsel %vm1151, %v265, 0
        %v1156 = vsel %vm1151, %v266, 0
        %v1159 = vsel %vm1151, %v267, 0
        %v1162 = vsel %vm1151, %v268, 0
        %1164 = vmatprep.subr.mxu0 0.0
        %1165 = vmatpush1.msra.mxu0 %v1131
        %1166 = vmatprep.subr.mxu0 0.0
        %1167 = vmatpush1.msra.mxu0 %v1132
        %1168 = vmatprep.subr.mxu0 0.0
        %1169 = vmatpush1.msra.mxu0 %v1149
        %1170 = vmatprep.subr.mxu0 0.0
        %1171 = vmatpush1.msra.mxu0 %v1150
        %1172 = vmatprep.subr.mxu0 0.0
        %1173 = vmatpush1.msra.mxu0 0.0
        %1174 = vmatprep.subr.mxu0 0.0
        %1175 = vmatpush1.msra.mxu0 0.0
        %1176 = vmatprep.subr.mxu0 0.0
        %1177 = vmatpush1.msra.mxu0 0.0
        %1178 = vmatprep.subr.mxu0 0.0
        %1179 = vmatpush1.msra.mxu0 0.0
        %1180 = vmatprep.subr.mxu0 0.0
        %1181 = vmatpush1.msra.mxu0 0.0
        %1182 = vmatprep.subr.mxu0 0.0
        %1183 = vmatpush1.msra.mxu0 0.0
        %1184 = vmatprep.subr.mxu0 0.0
        %1185 = vmatpush1.msra.mxu0 0.0
        %1186 = vmatprep.subr.mxu0 0.0
        %1187 = vmatpush1.msra.mxu0 0.0
        %1188 = vmatprep.subr.mxu0 0.0
        %1189 = vmatpush1.msra.mxu0 0.0
        %1190 = vmatprep.subr.mxu0 0.0
        %1191 = vmatpush1.msra.mxu0 0.0
        %1192 = vmatprep.subr.mxu0 0.0
        %1193 = vmatpush1.msra.mxu0 0.0
        %1194 = vmatprep.subr.mxu0 0.0
        %1195 = vmatpush1.msra.mxu0 0.0
        %1196 = vmatprep.subr.mxu0 0.0
        %1197 = vmatpush1.msra.mxu0 0.0
        %1198 = vmatprep.subr.mxu0 0.0
        %1199 = vmatpush1.msra.mxu0 0.0
        %1200 = vmatprep.subr.mxu0 0.0
        %1201 = vmatpush1.msra.mxu0 0.0
        %1202 = vmatprep.subr.mxu0 0.0
        %1203 = vmatpush1.msra.mxu0 0.0
        %1204 = vmatprep.subr.mxu0 0.0
        %1205 = vmatpush1.msra.mxu0 0.0
        %1206 = vmatprep.subr.mxu0 0.0
        %1207 = vmatpush1.msra.mxu0 0.0
        %1208 = vmatprep.subr.mxu0 0.0
        %1209 = vmatpush1.msra.mxu0 0.0
        %1210 = vmatprep.subr.mxu0 0.0
        %1211 = vmatpush1.msra.mxu0 0.0
        %1212 = vmatprep.subr.mxu0 0.0
        %1213 = vmatpush1.msra.mxu0 0.0
        %1214 = vmatprep.subr.mxu0 0.0
        %1215 = vmatpush1.msra.mxu0 0.0
        %1216 = vmatprep.subr.mxu0 0.0
        %1217 = vmatpush1.msra.mxu0 0.0
        %1218 = vmatprep.subr.mxu0 0.0
        %1219 = vmatpush1.msra.mxu0 0.0
        %1220 = vmatprep.subr.mxu0 0.0
        %1221 = vmatpush1.msra.mxu0 0.0
        %1222 = vmatprep.subr.mxu0 0.0
        %1223 = vmatpush1.msra.mxu0 0.0
        %1224 = vmatprep.subr.mxu0 0.0
        %1225 = vmatpush1.msra.mxu0 0.0
        %1226 = vmatprep.subr.mxu0 0.0
        %1227 = vmatpush1.msra.mxu0 0.0
        %1228 = vmatprep.mubr.f32.mxu0 0.0
        %1229 = vmatmul.mubr.f32.gmra.mrb[0].mxu0 %v1153
        %v1230 = vpop.f32.mrb[0].mxu0
        %v1231 = vadd.f32 0.0, %v1230
        %v1232 = vpop.f32.mrb[0].mxu0
        %1233 = vmatprep.mubr.f32.mxu0 0.0
        %1234 = vmatmul.mubr.f32.gmra.mrb[0].mxu0 %v1156
        %v1235 = vpop.f32.mrb[0].mxu0
        %v1236 = vadd.f32 0.0, %v1235
        %v1237 = vpop.f32.mrb[0].mxu0
        %1238 = vmatprep.mubr.f32.mxu0 0.0
        %1239 = vmatmul.mubr.f32.gmra.mrb[0].mxu0 %v1159
        %v1240 = vpop.f32.mrb[0].mxu0
        %v1241 = vadd.f32 0.0, %v1240
        %v1242 = vpop.f32.mrb[0].mxu0
        %1243 = vmatprep.mubr.f32.mxu0 0.0
        %1244 = vmatmul.mubr.f32.gmra.mrb[0].mxu0 %v1162
        %v1245 = vpop.f32.mrb[0].mxu0
        %v1246 = vadd.f32 0.0, %v1245
        %v1247 = vpop.f32.mrb[0].mxu0
        %1248 = vdwg.mxu0
        %1249 = vst.msk [vmem:[%s217] sm:$0xff] %vm1151, %v1231
        %1250 = vst.msk [vmem:[%s217 + $0x8] sm:$0xff] %vm1151, %v1236
        %1251 = vst.msk [vmem:[%s217 + $0x10] sm:$0xff] %vm1151, %v1241
        %1252 = vst.msk [vmem:[%s217 + $0x18] sm:$0xff] %vm1151, %v1246
        %1257 = vrot.lane.b32.xlu0 %v1231, 96
        %v1258 = vpop.permute.xlu0 %1257
        %1259 = vrot.lane.b32.xlu0 %v1236, 96
        %v1260 = vpop.permute.xlu0 %1259
        %1261 = vrot.lane.b32.xlu0 %v1241, 96
        %v1262 = vpop.permute.xlu0 %1261
        %1263 = vrot.lane.b32.xlu0 %v1246, 96
        %v1264 = vpop.permute.xlu0 %1263
        %s1269 = scalar_lea.vmem %s217, 32 [#allocation3]
        %1270 = vst.msk [vmem:[%s1269] sm:$0xff] %vm1151, %v1258
        %1271 = vst.msk [vmem:[%s1269 + $0x8] sm:$0xff] %vm1151, %v1260
        %1272 = vst.msk [vmem:[%s1269 + $0x10] sm:$0xff] %vm1151, %v1262
        %1273 = vst.msk [vmem:[%s1269 + $0x18] sm:$0xff] %vm1151, %v1264
        %1274 = vrot.lane.b32.xlu0 %v1231, 64
        %v1275 = vpop.permute.xlu0 %1274
        %1276 = vrot.lane.b32.xlu0 %v1236, 64
        %v1277 = vpop.permute.xlu0 %1276
        %1278 = vrot.lane.b32.xlu0 %v1241, 64
        %v1279 = vpop.permute.xlu0 %1278
        %1280 = vrot.lane.b32.xlu0 %v1246, 64
        %v1281 = vpop.permute.xlu0 %1280
        %s1286 = scalar_lea.vmem %s217, 64 [#allocation3]
        %1287 = vst.msk [vmem:[%s1286] sm:$0xff] %vm1151, %v1275
        %1288 = vst.msk [vmem:[%s1286 + $0x8] sm:$0xff] %vm1151, %v1277
        %1289 = vst.msk [vmem:[%s1286 + $0x10] sm:$0xff] %vm1151, %v1279
        %1290 = vst.msk [vmem:[%s1286 + $0x18] sm:$0xff] %vm1151, %v1281
        %1291 = vrot.lane.b32.xlu0 %v1231, 32
        %v1292 = vpop.permute.xlu0 %1291
        %1293 = vrot.lane.b32.xlu0 %v1236, 32
        %v1294 = vpop.permute.xlu0 %1293
        %1295 = vrot.lane.b32.xlu0 %v1241, 32
        %v1296 = vpop.permute.xlu0 %1295
        %1297 = vrot.lane.b32.xlu0 %v1246, 32
        %v1298 = vpop.permute.xlu0 %1297
        %s1303 = scalar_lea.vmem %s217, 96 [#allocation3]
        %1304 = vst.msk [vmem:[%s1303] sm:$0xff] %vm1151, %v1292
        %1305 = vst.msk [vmem:[%s1303 + $0x8] sm:$0xff] %vm1151, %v1294
        %1306 = vst.msk [vmem:[%s1303 + $0x10] sm:$0xff] %vm1151, %v1296
        %1307 = vst.msk [vmem:[%s1303 + $0x18] sm:$0xff] %vm1151, %v1298
        %s1308 = sand.u32 %s137, 1
        %s1309 = scalar_lea.sflag [#allocation4], %s1308
        %s1310 = sand.u32 %s137, 1
        %s1311 = smul.addr %s1310, 128
        %s1312 = scalar_lea.vmem [#allocation3], %s1311
        // Predicated region
        $region41: #{tpu_custom_call.1} parent=39 // pred_check
          %p1313 = pneg %p147
        $region42: #{tpu_custom_call.1} parent=39 // pred_check_branch
          %1315 = sbr.rel (%p1313) target = $region44
        $region43: #{tpu_custom_call.1} parent=39 // pred_region
          %s1317 = ssub.s32 2048, 2048
          %1318 = vsyncadd %s1309, %s1317
          %s1319 = smul.addr %s19, 16
          %s1320 = smul.addr %s1319, 128
          %s1321 = scalar_lea.hbm %s5, %s1320
          %s1322 = sshll.u32 %s1312, 4
          %s1323 = int_to_ptr.vmem [resolvable:$true] %s1322
          %1328 = dma.vmem_to_hbm [thread:$0]  %s1323, 2048, %s1321, %s1309, 128, 128, 8
        $region44: #{tpu_custom_call.1} parent=39 // pred_fallthru
          _
      $region40: #{tpu_custom_call.1} parent=5 // pred_fallthru
        _
      %p1329 = scmp.le.s32.totalorder 2, %s14
      // Predicated region
      $region45: #{tpu_custom_call.1} parent=5 // pred_check
        %p1330 = pneg %p1329
      $region46: #{tpu_custom_call.1} parent=5 // pred_check_branch
        %1332 = sbr.rel (%p1330) target = $region48
      $region47: #{tpu_custom_call.1} parent=5 // pred_region
        %s1333 = ssub.s32 %s14, 2
        // Predicated region
        $region49: #{tpu_custom_call.1} parent=47 // pred_check
          %p1334 = pneg %p153
        $region50: #{tpu_custom_call.1} parent=47 // pred_check_branch
          %1336 = sbr.rel (%p1334) target = $region52
        $region51: #{tpu_custom_call.1} parent=47 // pred_region
          %s1337 = sand.u32 %s138, 1
          %s1338 = scalar_lea.sflag [#allocation4], %s1337
          %s1339 = sand.u32 %s138, 1
          %s1340 = smul.addr %s1339, 128
          %s1341 = scalar_lea.vmem [#allocation3], %s1340
          %1342 = dma.done %s1338, 2048
        $region52: #{tpu_custom_call.1} parent=47 // pred_fallthru
          _
      $region48: #{tpu_custom_call.1} parent=5 // pred_fallthru
        _
    $region6: #{tpu_custom_call.1} parent=1 // loop_footer
      %s18 = sadd.s32 1, %s14
    $region7: #{tpu_custom_call.1} parent=1 // loop_footer_branch
      %13 = sbr.rel target = $region3
    $region8: #{tpu_custom_call.1} parent=1 // loop_exit
      _
    %1343 = vsyncpa [#allocation4], 1
    %s1344 = scalar_lea.sflag [#allocation4], 1
    %1345 = vsyncpa %s1344, 1

</llo_original>
